<compile_context>
chip_gen: v7x
topology: tpu7x:2x2x1
jax: 0.10.0
libtpu: 0.0.40
codegen_flags: <defaults>
</compile_context>

<pallas_src>
import functools

import jax
import jax.numpy as jnp
from jax.experimental import pallas as pl
from jax.experimental.pallas import tpu as pltpu

# Logical / padded hidden sizes (padding keeps all lane slices 128-aligned).
H1, H2 = 400, 300
H1P, H2P = 512, 384


def _critic_kernel(xu_ref,
                   w14_ref, b14_ref,
                   w2_ref, b2_ref,
                   w5_ref, b5_ref,
                   w36_ref, b36_ref,
                   q_ref):
    cd = w14_ref.dtype          # matmul compute dtype (bf16 or f32)
    xu = xu_ref[...]            # (tb, in_dim), already in compute dtype

    # Fused layer_1 | layer_4 on the shared input: one MXU launch.
    h = jnp.dot(xu, w14_ref[...], preferred_element_type=jnp.float32) + b14_ref[...]
    h = jnp.maximum(h, 0.0)                      # (tb, 2*H1P), f32

    # Lane-aligned split of the two branches (H1P = 512 = 4*128).
    h1 = h[:, :H1P].astype(cd)
    h2 = h[:, H1P:].astype(cd)

    # layer_2 / layer_5 (zero-padded to (512, 384)).
    g1 = jnp.maximum(
        jnp.dot(h1, w2_ref[...], preferred_element_type=jnp.float32) + b2_ref[...], 0.0)
    g2 = jnp.maximum(
        jnp.dot(h2, w5_ref[...], preferred_element_type=jnp.float32) + b5_ref[...], 0.0)

    # Fused block-diagonal final projection -> single (tb, 2) store.
    g = jnp.concatenate([g1.astype(cd), g2.astype(cd)], axis=1)   # (tb, 2*H2P)
    q = jnp.dot(g, w36_ref[...], preferred_element_type=jnp.float32) + b36_ref[...]
    q_ref[...] = q.astype(q_ref.dtype)


def init_critic_params(key, state_dim, action_dim):
    """PyTorch-default-style init: U(-1/sqrt(fan_in), 1/sqrt(fan_in)).

    Returns the 12 unpadded params (W already transposed to (in, out), b as (1, out)).
    """
    in_dim = state_dim + action_dim
    dims = [(in_dim, H1), (H1, H2), (H2, 1),    # Q1: layer_1..3
            (in_dim, H1), (H1, H2), (H2, 1)]    # Q2: layer_4..6
    params = []
    for (fan_in, fan_out) in dims:
        key, kw, kb = jax.random.split(key, 3)
        bound = 1.0 / jnp.sqrt(jnp.float32(fan_in))
        w = jax.random.uniform(kw, (fan_in, fan_out), jnp.float32, -bound, bound)
        b = jax.random.uniform(kb, (1, fan_out), jnp.float32, -bound, bound)
        params.append(w)
        params.append(b)
    return tuple(params)


def pack_critic_params(params, compute_dtype=jnp.bfloat16):
    """Pack/pad the 12 Linear params into the fused, lane-aligned kernel layout.

    Zero padding + zero padded biases keep the math exactly equivalent
    (ReLU(0)=0 and padded rows/cols contribute nothing downstream).
    """
    w1, b1, w2, b2, w3, b3, w4, b4, w5, b5, w6, b6 = params
    in_dim = w1.shape[0]

    w14 = jnp.zeros((in_dim, 2 * H1P), jnp.float32)
    w14 = w14.at[:, :H1].set(w1).at[:, H1P:H1P + H1].set(w4)
    b14 = jnp.zeros((1, 2 * H1P), jnp.float32)
    b14 = b14.at[:, :H1].set(b1).at[:, H1P:H1P + H1].set(b4)

    def _pad_mid(w, b):
        wp = jnp.zeros((H1P, H2P), jnp.float32).at[:H1, :H2].set(w)
        bp = jnp.zeros((1, H2P), jnp.float32).at[:, :H2].set(b)
        return wp, bp

    w2p, b2p = _pad_mid(w2, b2)
    w5p, b5p = _pad_mid(w5, b5)

    w36 = jnp.zeros((2 * H2P, 2), jnp.float32)
    w36 = w36.at[:H2, 0].set(w3[:, 0]).at[H2P:H2P + H2, 1].set(w6[:, 0])
    b36 = jnp.concatenate([b3, b6], axis=1)          # (1, 2)

    cd = compute_dtype
    # Weights in compute dtype (halves DMA/VMEM for bf16); biases stay f32.
    return (w14.astype(cd), b14,
            w2p.astype(cd), b2p,
            w5p.astype(cd), b5p,
            w36.astype(cd), b36)


def _round_up(v, m):
    return ((v + m - 1) // m) * m


@functools.partial(jax.jit, static_argnames=("batch_tile",))
def critic_forward(x, u, packed_params, batch_tile=256):
    """Pallas implementation of Critic.forward -> (q1, q2), each (B, 1)."""
    compute_dtype = packed_params[0].dtype
    xu = jnp.concatenate([x, u], axis=1).astype(compute_dtype)
    b, in_dim = xu.shape

    # Batch tile: as large as batch_tile allows, but keep >= 2 grid steps when
    # the batch permits so both v7x TensorCores get work.  Always a multiple of 8.
    tb = min(batch_tile, max(8, _round_up(-(-b // 2), 8)))
    b_pad = _round_up(b, tb)
    xu_p = xu if b_pad == b else jnp.pad(xu, ((0, b_pad - b), (0, 0)))

    grid = (b_pad // tb,)

    xu_spec = pl.BlockSpec((tb, in_dim), lambda i: (i, 0))
    param_specs = [pl.BlockSpec(p.shape, lambda i: (0, 0)) for p in packed_params]
    out_spec = pl.BlockSpec((tb, 2), lambda i: (i, 0))

    flops = 2 * b_pad * (in_dim * 2 * H1P + 2 * H1P * H2P + 2 * H2P * 2)
    bytes_accessed = (xu_p.size * xu_p.dtype.itemsize
                      + sum(p.size * p.dtype.itemsize for p in packed_params)
                      + b_pad * 2 * 4)

    q = pl.pallas_call(
        _critic_kernel,
        out_shape=jax.ShapeDtypeStruct((b_pad, 2), jnp.float32),
        grid_spec=pltpu.PrefetchScalarGridSpec(
            num_scalar_prefetch=0,
            grid=grid,
            in_specs=[xu_spec] + param_specs,
            out_specs=out_spec,
        ),
        compiler_params=pltpu.CompilerParams(
            dimension_semantics=("parallel",),
        ),
        cost_estimate=pl.CostEstimate(
            flops=flops, transcendentals=0, bytes_accessed=bytes_accessed),
    )(xu_p, *packed_params)

    return q[:b, 0:1], q[:b, 1:2]


def critic_forward_ref(x, u, params):
    """Pure-JAX f32 reference (mirrors the PyTorch module exactly)."""
    xu = jnp.concatenate([x, u], axis=1).astype(jnp.float32)
    w1, b1, w2, b2, w3, b3, w4, b4, w5, b5, w6, b6 = params
    h1 = jax.nn.relu(xu @ w1 + b1)
    h1 = jax.nn.relu(h1 @ w2 + b2)
    q1 = h1 @ w3 + b3
    h2 = jax.nn.relu(xu @ w4 + b4)
    h2 = jax.nn.relu(h2 @ w5 + b5)
    q2 = h2 @ w6 + b6
    return q1, q2


if __name__ == "__main__":
    # KivyCar TD3: state_dim = 5 (3 sensors + orientation, -orientation),
    # action_dim = 1 (rotation).
    state_dim, action_dim, batch = 5, 1, 8

    key = jax.random.PRNGKey(0)
    kx, ku, kp = jax.random.split(key, 3)
    x = jax.random.normal(kx, (batch, state_dim), jnp.float32)
    u = jax.random.normal(ku, (batch, action_dim), jnp.float32)
    params = init_critic_params(kp, state_dim, action_dim)

    q1_ref, q2_ref = critic_forward_ref(x, u, params)

    # 1) f32-matmul kernel: exact structural correctness check.
    packed_f32 = pack_critic_params(params, jnp.float32)
    q1, q2 = critic_forward(x, u, packed_f32)
    jax.block_until_ready((q1, q2))
    assert q1.shape == (batch, 1) and q2.shape == (batch, 1)
    assert jnp.allclose(q1, q1_ref, atol=1e-4, rtol=1e-4)
    assert jnp.allclose(q2, q2_ref, atol=1e-4, rtol=1e-4)

    # 2) bf16-matmul kernel (fast path, native MXU rate), f32 accumulation.
    packed_bf16 = pack_critic_params(params, jnp.bfloat16)
    q1b, q2b = critic_forward(x, u, packed_bf16)
    jax.block_until_ready((q1b, q2b))
    assert q1b.shape == (batch, 1) and q2b.shape == (batch, 1)
    assert jnp.allclose(q1b, q1_ref, atol=5e-2, rtol=5e-2)
    assert jnp.allclose(q2b, q2_ref, atol=5e-2, rtol=5e-2)

    print("KERNEL_OK")
</pallas_src>

<mosaic_0001>
module attributes {stable_mosaic.version = 11 : i64} {
  func.func @_critic_kernel(%arg0: i32, %arg1: memref<8x6xf32, #tpu.memory_space<vmem>>, %arg2: memref<6x1024xf32, #tpu.memory_space<vmem>>, %arg3: memref<1x1024xf32, #tpu.memory_space<vmem>>, %arg4: memref<512x384xf32, #tpu.memory_space<vmem>>, %arg5: memref<1x384xf32, #tpu.memory_space<vmem>>, %arg6: memref<512x384xf32, #tpu.memory_space<vmem>>, %arg7: memref<1x384xf32, #tpu.memory_space<vmem>>, %arg8: memref<768x2xf32, #tpu.memory_space<vmem>>, %arg9: memref<1x2xf32, #tpu.memory_space<vmem>>, %arg10: memref<8x2xf32, #tpu.memory_space<vmem>>) attributes {dimension_semantics = [#tpu.dimension_semantics<parallel>], iteration_bounds = array<i64: 1>, scalar_prefetch = 0 : i64, scratch_operands = 0 : i64, tpu.core_type = #tpu.core_type<tc>, window_params = [{transform_indices = @transform_0, window_bounds = array<i64: 8, 6>}, {pipeline_mode = #tpu.pipeline_mode<synchronous>, transform_indices = @transform_1, window_bounds = array<i64: 6, 1024>}, {pipeline_mode = #tpu.pipeline_mode<synchronous>, transform_indices = @transform_2, window_bounds = array<i64: 1, 1024>}, {pipeline_mode = #tpu.pipeline_mode<synchronous>, transform_indices = @transform_3, window_bounds = array<i64: 512, 384>}, {pipeline_mode = #tpu.pipeline_mode<synchronous>, transform_indices = @transform_4, window_bounds = array<i64: 1, 384>}, {pipeline_mode = #tpu.pipeline_mode<synchronous>, transform_indices = @transform_5, window_bounds = array<i64: 512, 384>}, {pipeline_mode = #tpu.pipeline_mode<synchronous>, transform_indices = @transform_6, window_bounds = array<i64: 1, 384>}, {pipeline_mode = #tpu.pipeline_mode<synchronous>, transform_indices = @transform_7, window_bounds = array<i64: 768, 2>}, {pipeline_mode = #tpu.pipeline_mode<synchronous>, transform_indices = @transform_8, window_bounds = array<i64: 1, 2>}, {transform_indices = @transform_9, window_bounds = array<i64: 8, 2>}]} {
    %c0 = arith.constant 0 : index
    %c0_0 = arith.constant 0 : index
    %0 = vector.load %arg1[%c0, %c0_0] : memref<8x6xf32, #tpu.memory_space<vmem>>, vector<8x6xf32>
    %c0_1 = arith.constant 0 : index
    %c0_2 = arith.constant 0 : index
    %1 = vector.load %arg2[%c0_1, %c0_2] : memref<6x1024xf32, #tpu.memory_space<vmem>>, vector<6x1024xf32>
    %cst = arith.constant dense<0.000000e+00> : vector<8x1024xf32>
    %2 = tpu.matmul %0, %1, %cst {dimension_numbers = #tpu.dot_dimension_numbers<[1], [0], [0], [1], [0, 0, 1, 1], [], []>} : vector<8x6xf32>, vector<6x1024xf32>, vector<8x1024xf32> -> vector<8x1024xf32>
    %c0_3 = arith.constant 0 : index
    %c0_4 = arith.constant 0 : index
    %3 = vector.load %arg3[%c0_3, %c0_4] : memref<1x1024xf32, #tpu.memory_space<vmem>>, vector<1x1024xf32>
    %4 = vector.broadcast %3 : vector<1x1024xf32> to vector<8x1024xf32>
    %5 = arith.addf %2, %4 : vector<8x1024xf32>
    %cst_5 = arith.constant 0.000000e+00 : f32
    %6 = vector.broadcast %cst_5 : f32 to vector<8x1024xf32>
    %7 = arith.maximumf %5, %6 : vector<8x1024xf32>
    %8 = vector.extract_strided_slice %7 {offsets = [0, 0], sizes = [8, 512], strides = [1, 1]} : vector<8x1024xf32> to vector<8x512xf32>
    %9 = vector.extract_strided_slice %7 {offsets = [0, 512], sizes = [8, 512], strides = [1, 1]} : vector<8x1024xf32> to vector<8x512xf32>
    %c0_6 = arith.constant 0 : index
    %c0_7 = arith.constant 0 : index
    %10 = vector.load %arg4[%c0_6, %c0_7] : memref<512x384xf32, #tpu.memory_space<vmem>>, vector<512x384xf32>
    %cst_8 = arith.constant dense<0.000000e+00> : vector<8x384xf32>
    %11 = tpu.matmul %8, %10, %cst_8 {dimension_numbers = #tpu.dot_dimension_numbers<[1], [0], [0], [1], [0, 0, 1, 1], [], []>} : vector<8x512xf32>, vector<512x384xf32>, vector<8x384xf32> -> vector<8x384xf32>
    %c0_9 = arith.constant 0 : index
    %c0_10 = arith.constant 0 : index
    %12 = vector.load %arg5[%c0_9, %c0_10] : memref<1x384xf32, #tpu.memory_space<vmem>>, vector<1x384xf32>
    %13 = vector.broadcast %12 : vector<1x384xf32> to vector<8x384xf32>
    %14 = arith.addf %11, %13 : vector<8x384xf32>
    %cst_11 = arith.constant 0.000000e+00 : f32
    %15 = vector.broadcast %cst_11 : f32 to vector<8x384xf32>
    %16 = arith.maximumf %14, %15 : vector<8x384xf32>
    %c0_12 = arith.constant 0 : index
    %c0_13 = arith.constant 0 : index
    %17 = vector.load %arg6[%c0_12, %c0_13] : memref<512x384xf32, #tpu.memory_space<vmem>>, vector<512x384xf32>
    %cst_14 = arith.constant dense<0.000000e+00> : vector<8x384xf32>
    %18 = tpu.matmul %9, %17, %cst_14 {dimension_numbers = #tpu.dot_dimension_numbers<[1], [0], [0], [1], [0, 0, 1, 1], [], []>} : vector<8x512xf32>, vector<512x384xf32>, vector<8x384xf32> -> vector<8x384xf32>
    %c0_15 = arith.constant 0 : index
    %c0_16 = arith.constant 0 : index
    %19 = vector.load %arg7[%c0_15, %c0_16] : memref<1x384xf32, #tpu.memory_space<vmem>>, vector<1x384xf32>
    %20 = vector.broadcast %19 : vector<1x384xf32> to vector<8x384xf32>
    %21 = arith.addf %18, %20 : vector<8x384xf32>
    %cst_17 = arith.constant 0.000000e+00 : f32
    %22 = vector.broadcast %cst_17 : f32 to vector<8x384xf32>
    %23 = arith.maximumf %21, %22 : vector<8x384xf32>
    %24 = tpu.concatenate %16, %23 in 1 : vector<8x384xf32>, vector<8x384xf32> -> vector<8x768xf32>
    %c0_18 = arith.constant 0 : index
    %c0_19 = arith.constant 0 : index
    %25 = vector.load %arg8[%c0_18, %c0_19] : memref<768x2xf32, #tpu.memory_space<vmem>>, vector<768x2xf32>
    %cst_20 = arith.constant dense<0.000000e+00> : vector<8x2xf32>
    %26 = tpu.matmul %24, %25, %cst_20 {dimension_numbers = #tpu.dot_dimension_numbers<[1], [0], [0], [1], [0, 0, 1, 1], [], []>} : vector<8x768xf32>, vector<768x2xf32>, vector<8x2xf32> -> vector<8x2xf32>
    %c0_21 = arith.constant 0 : index
    %c0_22 = arith.constant 0 : index
    %27 = vector.load %arg9[%c0_21, %c0_22] : memref<1x2xf32, #tpu.memory_space<vmem>>, vector<1x2xf32>
    %28 = vector.broadcast %27 : vector<1x2xf32> to vector<8x2xf32>
    %29 = arith.addf %26, %28 : vector<8x2xf32>
    %c0_23 = arith.constant 0 : index
    %c0_24 = arith.constant 0 : index
    %30 = vector.load %arg10[%c0_23, %c0_24] : memref<8x2xf32, #tpu.memory_space<vmem>>, vector<8x2xf32>
    tpu.vector_store %arg10[%c0_23, %c0_24], %29 {strides = array<i32>} : memref<8x2xf32, #tpu.memory_space<vmem>>, vector<8x2xf32>,
    return
  }
  func.func @transform_0(%arg0: i32) -> (i32, i32) {
    %c0_i32 = arith.constant 0 : i32
    %c0_i32_0 = arith.constant 0 : i32
    return %arg0, %c0_i32 : i32, i32
  }
  func.func @transform_1(%arg0: i32) -> (i32, i32) {
    %c0_i32 = arith.constant 0 : i32
    %c0_i32_0 = arith.constant 0 : i32
    %c0_i32_1 = arith.constant 0 : i32
    return %c0_i32, %c0_i32_0 : i32, i32
  }
  func.func @transform_2(%arg0: i32) -> (i32, i32) {
    %c0_i32 = arith.constant 0 : i32
    %c0_i32_0 = arith.constant 0 : i32
    %c0_i32_1 = arith.constant 0 : i32
    return %c0_i32, %c0_i32_0 : i32, i32
  }
  func.func @transform_3(%arg0: i32) -> (i32, i32) {
    %c0_i32 = arith.constant 0 : i32
    %c0_i32_0 = arith.constant 0 : i32
    %c0_i32_1 = arith.constant 0 : i32
    return %c0_i32, %c0_i32_0 : i32, i32
  }
  func.func @transform_4(%arg0: i32) -> (i32, i32) {
    %c0_i32 = arith.constant 0 : i32
    %c0_i32_0 = arith.constant 0 : i32
    %c0_i32_1 = arith.constant 0 : i32
    return %c0_i32, %c0_i32_0 : i32, i32
  }
  func.func @transform_5(%arg0: i32) -> (i32, i32) {
    %c0_i32 = arith.constant 0 : i32
    %c0_i32_0 = arith.constant 0 : i32
    %c0_i32_1 = arith.constant 0 : i32
    return %c0_i32, %c0_i32_0 : i32, i32
  }
  func.func @transform_6(%arg0: i32) -> (i32, i32) {
    %c0_i32 = arith.constant 0 : i32
    %c0_i32_0 = arith.constant 0 : i32
    %c0_i32_1 = arith.constant 0 : i32
    return %c0_i32, %c0_i32_0 : i32, i32
  }
  func.func @transform_7(%arg0: i32) -> (i32, i32) {
    %c0_i32 = arith.constant 0 : i32
    %c0_i32_0 = arith.constant 0 : i32
    %c0_i32_1 = arith.constant 0 : i32
    return %c0_i32, %c0_i32_0 : i32, i32
  }
  func.func @transform_8(%arg0: i32) -> (i32, i32) {
    %c0_i32 = arith.constant 0 : i32
    %c0_i32_0 = arith.constant 0 : i32
    %c0_i32_1 = arith.constant 0 : i32
    return %c0_i32, %c0_i32_0 : i32, i32
  }
  func.func @transform_9(%arg0: i32) -> (i32, i32) {
    %c0_i32 = arith.constant 0 : i32
    %c0_i32_0 = arith.constant 0 : i32
    return %arg0, %c0_i32 : i32, i32
  }
}

</mosaic_0001>

<llo_original>
// kernel: critic_forward.1
$region0: #{critic_forward.1}
  #allocation0 [shape = 'u32[]', space=smem, size = 0x4, offset = 0x4, fixed_abs, tag = 'smem constant byte address 0x4 - core index']
  #allocation1 [shape = 'u32[144,128]{1,0:T(1,128)}', space=vmem, size = 0x12000, scoped, tag = 'internal scratch']
  %s0 = inlined_call_operand.vmem [shape: f32[8,6], index: 0, kind: input, shape index: {}]
  %s1 = inlined_call_operand.vmem [shape: f32[6,1024], index: 1, kind: input, shape index: {}]
  %s2 = inlined_call_operand.vmem [shape: f32[1,1024], index: 2, kind: input, shape index: {}]
  %s3 = inlined_call_operand.hbm [shape: f32[512,384], index: 3, kind: input, shape index: {}]
  %s4 = inlined_call_operand.vmem [shape: f32[1,384], index: 4, kind: input, shape index: {}]
  %s5 = inlined_call_operand.hbm [shape: f32[512,384], index: 5, kind: input, shape index: {}]
  %s6 = inlined_call_operand.vmem [shape: f32[1,384], index: 6, kind: input, shape index: {}]
  %s7 = inlined_call_operand.vmem [shape: f32[768,2], index: 7, kind: input, shape index: {}]
  %s8 = inlined_call_operand.vmem [shape: f32[1,2], index: 8, kind: input, shape index: {}]
  %s9 = inlined_call_operand.vmem [shape: f32[8,2], index: 9, kind: output, shape index: {}]
  %s10 = sld [smem:[#allocation0]]
  $region54: #{critic_forward.1} parent=0
    _
  %s12 = ssub.s32 1, %s10
  %s13 = scalar_select 0, %s12, %s10
  $region1: #{critic_forward.1} parent=0
    #allocation2 [shape = 'u8[786432]{0}', space=vmem, size = 0xc0000, scoped, tag = 'input window, operand 3, single buffered']
    #allocation3 [shape = 's32[1]{0}', space=sflag, size = 0x4, scoped, tag = 'scoped memory for critic_forward.1']
    #allocation4 [shape = 'u8[786432]{0}', space=vmem, size = 0xc0000, scoped, tag = 'input window, operand 5, single buffered']
    #allocation5 [shape = 's32[1]{0}', space=sflag, size = 0x4, scoped, tag = 'scoped memory for critic_forward.1']
    %14 = vsyncpa [#allocation3], 0
    %15 = vsyncpa [#allocation5], 0
    // Predicated region
    $region2: #{critic_forward.1} parent=1 // pred_check
      _
    $region3: #{critic_forward.1} parent=1 // pred_check_branch
      %17 = sbr.rel (0) target = $region5
    $region4: #{critic_forward.1} parent=1 // pred_region
      _
    $region5: #{critic_forward.1} parent=1 // pred_fallthru
      _
    // Predicated region
    $region6: #{critic_forward.1} parent=1 // pred_check
      _
    $region7: #{critic_forward.1} parent=1 // pred_check_branch
      %19 = sbr.rel (0) target = $region9
    $region8: #{critic_forward.1} parent=1 // pred_region
      _
    $region9: #{critic_forward.1} parent=1 // pred_fallthru
      _
    // Predicated region
    $region10: #{critic_forward.1} parent=1 // pred_check
      _
    $region11: #{critic_forward.1} parent=1 // pred_check_branch
      %21 = sbr.rel (0) target = $region13
    $region12: #{critic_forward.1} parent=1 // pred_region
      _
    $region13: #{critic_forward.1} parent=1 // pred_fallthru
      _
    // Predicated region
    $region14: #{critic_forward.1} parent=1 // pred_check
      _
    $region15: #{critic_forward.1} parent=1 // pred_check_branch
      %23 = sbr.rel (0) target = $region17
    $region16: #{critic_forward.1} parent=1 // pred_region
      %s25 = ssub.s32 24576, 24576
      %26 = vsyncadd [#allocation3], %s25
      %s27 = sshll.u32 [#allocation2], 4
      %s28 = int_to_ptr.vmem [resolvable:$true] %s27
      %33 = dma.hbm_to_vmem [thread:$0]  %s3, 24576, %s28, [#allocation3], 384, 384, 24
    $region17: #{critic_forward.1} parent=1 // pred_fallthru
      _
    // Predicated region
    $region18: #{critic_forward.1} parent=1 // pred_check
      _
    $region19: #{critic_forward.1} parent=1 // pred_check_branch
      %35 = sbr.rel (0) target = $region21
    $region20: #{critic_forward.1} parent=1 // pred_region
      _
    $region21: #{critic_forward.1} parent=1 // pred_fallthru
      _
    // Predicated region
    $region22: #{critic_forward.1} parent=1 // pred_check
      _
    $region23: #{critic_forward.1} parent=1 // pred_check_branch
      %37 = sbr.rel (0) target = $region25
    $region24: #{critic_forward.1} parent=1 // pred_region
      %s39 = ssub.s32 24576, 24576
      %40 = vsyncadd [#allocation5], %s39
      %s41 = sshll.u32 [#allocation4], 4
      %s42 = int_to_ptr.vmem [resolvable:$true] %s41
      %47 = dma.hbm_to_vmem [thread:$0]  %s5, 24576, %s42, [#allocation5], 384, 384, 24
    $region25: #{critic_forward.1} parent=1 // pred_fallthru
      _
    // Predicated region
    $region26: #{critic_forward.1} parent=1 // pred_check
      _
    $region27: #{critic_forward.1} parent=1 // pred_check_branch
      %49 = sbr.rel (0) target = $region29
    $region28: #{critic_forward.1} parent=1 // pred_region
      _
    $region29: #{critic_forward.1} parent=1 // pred_fallthru
      _
    // Predicated region
    $region30: #{critic_forward.1} parent=1 // pred_check
      _
    $region31: #{critic_forward.1} parent=1 // pred_check_branch
      %51 = sbr.rel (0) target = $region33
    $region32: #{critic_forward.1} parent=1 // pred_region
      _
    $region33: #{critic_forward.1} parent=1 // pred_fallthru
      _
    // Predicated region
    $region34: #{critic_forward.1} parent=1 // pred_check
      _
    $region35: #{critic_forward.1} parent=1 // pred_check_branch
      %53 = sbr.rel (0) target = $region37
    $region36: #{critic_forward.1} parent=1 // pred_region
      _
    $region37: #{critic_forward.1} parent=1 // pred_fallthru
      _
    // Predicated region
    $region38: #{critic_forward.1} parent=1 // pred_check
      _
    $region39: #{critic_forward.1} parent=1 // pred_check_branch
      %55 = sbr.rel (0) target = $region41
    $region40: #{critic_forward.1} parent=1 // pred_region
      %56 = dma.done [#allocation3], 24576
    $region41: #{critic_forward.1} parent=1 // pred_fallthru
      _
    // Predicated region
    $region42: #{critic_forward.1} parent=1 // pred_check
      _
    $region43: #{critic_forward.1} parent=1 // pred_check_branch
      %58 = sbr.rel (0) target = $region45
    $region44: #{critic_forward.1} parent=1 // pred_region
      %59 = dma.done [#allocation5], 24576
    $region45: #{critic_forward.1} parent=1 // pred_fallthru
      _
    %v60 = vld [vmem:[%s0] sm:$0xff]
    %v61 = vld [vmem:[%s1] sm:$0x3f]
    %v62 = vld [vmem:[%s1 + $0x8] sm:$0x3f]
    %v63 = vld [vmem:[%s1 + $0x10] sm:$0x3f]
    %v64 = vld [vmem:[%s1 + $0x18] sm:$0x3f]
    %v65 = vld [vmem:[%s1 + $0x20] sm:$0x3f]
    %v66 = vld [vmem:[%s1 + $0x28] sm:$0x3f]
    %v67 = vld [vmem:[%s1 + $0x30] sm:$0x3f]
    %v68 = vld [vmem:[%s1 + $0x38] sm:$0x3f]
    %v69 = vld [vmem:[%s2] sm:$0xff]
    %v71 = vlaneseq
    %v72 = vshrl.u32 %v71, 7
    %v73 = vsub.s32 0, %v72
    %v74 = vrot.slane %v69, %v73
    %v75 = vlaneseq
    %v76 = vshrl.u32 %v75, 7
    %v77 = vsub.s32 1, %v76
    %v78 = vrot.slane %v69, %v77
    %v79 = vlaneseq
    %v80 = vshrl.u32 %v79, 7
    %v81 = vsub.s32 2, %v80
    %v82 = vrot.slane %v69, %v81
    %v83 = vlaneseq
    %v84 = vshrl.u32 %v83, 7
    %v85 = vsub.s32 3, %v84
    %v86 = vrot.slane %v69, %v85
    %v87 = vlaneseq
    %v88 = vshrl.u32 %v87, 7
    %v89 = vsub.s32 4, %v88
    %v90 = vrot.slane %v69, %v89
    %v91 = vlaneseq
    %v92 = vshrl.u32 %v91, 7
    %v93 = vsub.s32 5, %v92
    %v94 = vrot.slane %v69, %v93
    %v95 = vlaneseq
    %v96 = vshrl.u32 %v95, 7
    %v97 = vsub.s32 6, %v96
    %v98 = vrot.slane %v69, %v97
    %v99 = vlaneseq
    %v100 = vshrl.u32 %v99, 7
    %v101 = vsub.s32 7, %v100
    %v102 = vrot.slane %v69, %v101
    %vm111 = vcmask 48128
    %v113 = vsel %vm111, %v60, 0
    %vm115 = vcmask 1045504
    %v117 = vsel %vm115, %v61, 0
    %v120 = vsel %vm115, %v62, 0
    %v123 = vsel %vm115, %v63, 0
    %v126 = vsel %vm115, %v64, 0
    %v129 = vsel %vm115, %v65, 0
    %v132 = vsel %vm115, %v66, 0
    %v135 = vsel %vm115, %v67, 0
    %v138 = vsel %vm115, %v68, 0
    %140 = vmatprep.subr.mxu0 %v120
    %141 = vmatpush1.msra.mxu0 %v117
    %142 = vmatprep.subr.mxu0 0.0
    %143 = vmatpush1.msra.mxu0 0.0
    %144 = vmatprep.subr.mxu0 0.0
    %145 = vmatpush1.msra.mxu0 0.0
    %146 = vmatprep.subr.mxu0 0.0
    %147 = vmatpush1.msra.mxu0 0.0
    %148 = vmatprep.subr.mxu0 0.0
    %149 = vmatpush1.msra.mxu0 0.0
    %150 = vmatprep.subr.mxu0 0.0
    %151 = vmatpush1.msra.mxu0 0.0
    %152 = vmatprep.subr.mxu0 0.0
    %153 = vmatpush1.msra.mxu0 0.0
    %154 = vmatprep.subr.mxu0 0.0
    %155 = vmatpush1.msra.mxu0 0.0
    %156 = vmatprep.subr.mxu0 0.0
    %157 = vmatpush1.msra.mxu0 0.0
    %158 = vmatprep.subr.mxu0 0.0
    %159 = vmatpush1.msra.mxu0 0.0
    %160 = vmatprep.subr.mxu0 0.0
    %161 = vmatpush1.msra.mxu0 0.0
    %162 = vmatprep.subr.mxu0 0.0
    %163 = vmatpush1.msra.mxu0 0.0
    %164 = vmatprep.subr.mxu0 0.0
    %165 = vmatpush1.msra.mxu0 0.0
    %166 = vmatprep.subr.mxu0 0.0
    %167 = vmatpush1.msra.mxu0 0.0
    %168 = vmatprep.subr.mxu0 0.0
    %169 = vmatpush1.msra.mxu0 0.0
    %170 = vmatprep.subr.mxu0 0.0
    %171 = vmatpush1.msra.mxu0 0.0
    %172 = vmatprep.subr.mxu0 0.0
    %173 = vmatpush1.msra.mxu0 0.0
    %174 = vmatprep.subr.mxu0 0.0
    %175 = vmatpush1.msra.mxu0 0.0
    %176 = vmatprep.subr.mxu0 0.0
    %177 = vmatpush1.msra.mxu0 0.0
    %178 = vmatprep.subr.mxu0 0.0
    %179 = vmatpush1.msra.mxu0 0.0
    %180 = vmatprep.subr.mxu0 0.0
    %181 = vmatpush1.msra.mxu0 0.0
    %182 = vmatprep.subr.mxu0 0.0
    %183 = vmatpush1.msra.mxu0 0.0
    %184 = vmatprep.subr.mxu0 0.0
    %185 = vmatpush1.msra.mxu0 0.0
    %186 = vmatprep.subr.mxu0 0.0
    %187 = vmatpush1.msra.mxu0 0.0
    %188 = vmatprep.subr.mxu0 0.0
    %189 = vmatpush1.msra.mxu0 0.0
    %190 = vmatprep.subr.mxu0 0.0
    %191 = vmatpush1.msra.mxu0 0.0
    %192 = vmatprep.subr.mxu0 0.0
    %193 = vmatpush1.msra.mxu0 0.0
    %194 = vmatprep.subr.mxu0 0.0
    %195 = vmatpush1.msra.mxu0 0.0
    %196 = vmatprep.subr.mxu0 0.0
    %197 = vmatpush1.msra.mxu0 0.0
    %198 = vmatprep.subr.mxu0 0.0
    %199 = vmatpush1.msra.mxu0 0.0
    %200 = vmatprep.subr.mxu0 0.0
    %201 = vmatpush1.msra.mxu0 0.0
    %202 = vmatprep.subr.mxu0 0.0
    %203 = vmatpush1.msra.mxu0 0.0
    %204 = vmatprep.mubr.f32.mxu0 0.0
    %205 = vmatmul.mubr.f32.gmra.mrb[0].mxu0 %v113
    %v206 = vpop.f32.mrb[0].mxu0
    %v207 = vadd.f32 %v74, %v206
    %v208 = vpop.f32.mrb[0].mxu0
    %v209 = vadd.f32 %v78, %v208
    %210 = vdwg.mxu0
    %211 = vmatprep.subr.mxu0 %v126
    %212 = vmatpush1.msra.mxu0 %v123
    %213 = vmatprep.subr.mxu0 0.0
    %214 = vmatpush1.msra.mxu0 0.0
    %215 = vmatprep.subr.mxu0 0.0
    %216 = vmatpush1.msra.mxu0 0.0
    %217 = vmatprep.subr.mxu0 0.0
    %218 = vmatpush1.msra.mxu0 0.0
    %219 = vmatprep.subr.mxu0 0.0
    %220 = vmatpush1.msra.mxu0 0.0
    %221 = vmatprep.subr.mxu0 0.0
    %222 = vmatpush1.msra.mxu0 0.0
    %223 = vmatprep.subr.mxu0 0.0
    %224 = vmatpush1.msra.mxu0 0.0
    %225 = vmatprep.subr.mxu0 0.0
    %226 = vmatpush1.msra.mxu0 0.0
    %227 = vmatprep.subr.mxu0 0.0
    %228 = vmatpush1.msra.mxu0 0.0
    %229 = vmatprep.subr.mxu0 0.0
    %230 = vmatpush1.msra.mxu0 0.0
    %231 = vmatprep.subr.mxu0 0.0
    %232 = vmatpush1.msra.mxu0 0.0
    %233 = vmatprep.subr.mxu0 0.0
    %234 = vmatpush1.msra.mxu0 0.0
    %235 = vmatprep.subr.mxu0 0.0
    %236 = vmatpush1.msra.mxu0 0.0
    %237 = vmatprep.subr.mxu0 0.0
    %238 = vmatpush1.msra.mxu0 0.0
    %239 = vmatprep.subr.mxu0 0.0
    %240 = vmatpush1.msra.mxu0 0.0
    %241 = vmatprep.subr.mxu0 0.0
    %242 = vmatpush1.msra.mxu0 0.0
    %243 = vmatprep.subr.mxu0 0.0
    %244 = vmatpush1.msra.mxu0 0.0
    %245 = vmatprep.subr.mxu0 0.0
    %246 = vmatpush1.msra.mxu0 0.0
    %247 = vmatprep.subr.mxu0 0.0
    %248 = vmatpush1.msra.mxu0 0.0
    %249 = vmatprep.subr.mxu0 0.0
    %250 = vmatpush1.msra.mxu0 0.0
    %251 = vmatprep.subr.mxu0 0.0
    %252 = vmatpush1.msra.mxu0 0.0
    %253 = vmatprep.subr.mxu0 0.0
    %254 = vmatpush1.msra.mxu0 0.0
    %255 = vmatprep.subr.mxu0 0.0
    %256 = vmatpush1.msra.mxu0 0.0
    %257 = vmatprep.subr.mxu0 0.0
    %258 = vmatpush1.msra.mxu0 0.0
    %259 = vmatprep.subr.mxu0 0.0
    %260 = vmatpush1.msra.mxu0 0.0
    %261 = vmatprep.subr.mxu0 0.0
    %262 = vmatpush1.msra.mxu0 0.0
    %263 = vmatprep.subr.mxu0 0.0
    %264 = vmatpush1.msra.mxu0 0.0
    %265 = vmatprep.subr.mxu0 0.0
    %266 = vmatpush1.msra.mxu0 0.0
    %267 = vmatprep.subr.mxu0 0.0
    %268 = vmatpush1.msra.mxu0 0.0
    %269 = vmatprep.subr.mxu0 0.0
    %270 = vmatpush1.msra.mxu0 0.0
    %271 = vmatprep.subr.mxu0 0.0
    %272 = vmatpush1.msra.mxu0 0.0
    %273 = vmatprep.subr.mxu0 0.0
    %274 = vmatpush1.msra.mxu0 0.0
    %275 = vmatprep.mubr.f32.mxu0 0.0
    %276 = vmatmul.mubr.f32.gmra.mrb[0].mxu0 %v113
    %v277 = vpop.f32.mrb[0].mxu0
    %v278 = vadd.f32 %v82, %v277
    %v279 = vpop.f32.mrb[0].mxu0
    %v280 = vadd.f32 %v86, %v279
    %281 = vdwg.mxu0
    %282 = vmatprep.subr.mxu0 %v132
    %283 = vmatpush1.msra.mxu0 %v129
    %284 = vmatprep.subr.mxu0 0.0
    %285 = vmatpush1.msra.mxu0 0.0
    %286 = vmatprep.subr.mxu0 0.0
    %287 = vmatpush1.msra.mxu0 0.0
    %288 = vmatprep.subr.mxu0 0.0
    %289 = vmatpush1.msra.mxu0 0.0
    %290 = vmatprep.subr.mxu0 0.0
    %291 = vmatpush1.msra.mxu0 0.0
    %292 = vmatprep.subr.mxu0 0.0
    %293 = vmatpush1.msra.mxu0 0.0
    %294 = vmatprep.subr.mxu0 0.0
    %295 = vmatpush1.msra.mxu0 0.0
    %296 = vmatprep.subr.mxu0 0.0
    %297 = vmatpush1.msra.mxu0 0.0
    %298 = vmatprep.subr.mxu0 0.0
    %299 = vmatpush1.msra.mxu0 0.0
    %300 = vmatprep.subr.mxu0 0.0
    %301 = vmatpush1.msra.mxu0 0.0
    %302 = vmatprep.subr.mxu0 0.0
    %303 = vmatpush1.msra.mxu0 0.0
    %304 = vmatprep.subr.mxu0 0.0
    %305 = vmatpush1.msra.mxu0 0.0
    %306 = vmatprep.subr.mxu0 0.0
    %307 = vmatpush1.msra.mxu0 0.0
    %308 = vmatprep.subr.mxu0 0.0
    %309 = vmatpush1.msra.mxu0 0.0
    %310 = vmatprep.subr.mxu0 0.0
    %311 = vmatpush1.msra.mxu0 0.0
    %312 = vmatprep.subr.mxu0 0.0
    %313 = vmatpush1.msra.mxu0 0.0
    %314 = vmatprep.subr.mxu0 0.0
    %315 = vmatpush1.msra.mxu0 0.0
    %316 = vmatprep.subr.mxu0 0.0
    %317 = vmatpush1.msra.mxu0 0.0
    %318 = vmatprep.subr.mxu0 0.0
    %319 = vmatpush1.msra.mxu0 0.0
    %320 = vmatprep.subr.mxu0 0.0
    %321 = vmatpush1.msra.mxu0 0.0
    %322 = vmatprep.subr.mxu0 0.0
    %323 = vmatpush1.msra.mxu0 0.0
    %324 = vmatprep.subr.mxu0 0.0
    %325 = vmatpush1.msra.mxu0 0.0
    %326 = vmatprep.subr.mxu0 0.0
    %327 = vmatpush1.msra.mxu0 0.0
    %328 = vmatprep.subr.mxu0 0.0
    %329 = vmatpush1.msra.mxu0 0.0
    %330 = vmatprep.subr.mxu0 0.0
    %331 = vmatpush1.msra.mxu0 0.0
    %332 = vmatprep.subr.mxu0 0.0
    %333 = vmatpush1.msra.mxu0 0.0
    %334 = vmatprep.subr.mxu0 0.0
    %335 = vmatpush1.msra.mxu0 0.0
    %336 = vmatprep.subr.mxu0 0.0
    %337 = vmatpush1.msra.mxu0 0.0
    %338 = vmatprep.subr.mxu0 0.0
    %339 = vmatpush1.msra.mxu0 0.0
    %340 = vmatprep.subr.mxu0 0.0
    %341 = vmatpush1.msra.mxu0 0.0
    %342 = vmatprep.subr.mxu0 0.0
    %343 = vmatpush1.msra.mxu0 0.0
    %344 = vmatprep.subr.mxu0 0.0
    %345 = vmatpush1.msra.mxu0 0.0
    %346 = vmatprep.mubr.f32.mxu0 0.0
    %347 = vmatmul.mubr.f32.gmra.mrb[0].mxu0 %v113
    %v348 = vpop.f32.mrb[0].mxu0
    %v349 = vadd.f32 %v90, %v348
    %v350 = vpop.f32.mrb[0].mxu0
    %v351 = vadd.f32 %v94, %v350
    %352 = vdwg.mxu0
    %353 = vmatprep.subr.mxu0 %v138
    %354 = vmatpush1.msra.mxu0 %v135
    %355 = vmatprep.subr.mxu0 0.0
    %356 = vmatpush1.msra.mxu0 0.0
    %357 = vmatprep.subr.mxu0 0.0
    %358 = vmatpush1.msra.mxu0 0.0
    %359 = vmatprep.subr.mxu0 0.0
    %360 = vmatpush1.msra.mxu0 0.0
    %361 = vmatprep.subr.mxu0 0.0
    %362 = vmatpush1.msra.mxu0 0.0
    %363 = vmatprep.subr.mxu0 0.0
    %364 = vmatpush1.msra.mxu0 0.0
    %365 = vmatprep.subr.mxu0 0.0
    %366 = vmatpush1.msra.mxu0 0.0
    %367 = vmatprep.subr.mxu0 0.0
    %368 = vmatpush1.msra.mxu0 0.0
    %369 = vmatprep.subr.mxu0 0.0
    %370 = vmatpush1.msra.mxu0 0.0
    %371 = vmatprep.subr.mxu0 0.0
    %372 = vmatpush1.msra.mxu0 0.0
    %373 = vmatprep.subr.mxu0 0.0
    %374 = vmatpush1.msra.mxu0 0.0
    %375 = vmatprep.subr.mxu0 0.0
    %376 = vmatpush1.msra.mxu0 0.0
    %377 = vmatprep.subr.mxu0 0.0
    %378 = vmatpush1.msra.mxu0 0.0
    %379 = vmatprep.subr.mxu0 0.0
    %380 = vmatpush1.msra.mxu0 0.0
    %381 = vmatprep.subr.mxu0 0.0
    %382 = vmatpush1.msra.mxu0 0.0
    %383 = vmatprep.subr.mxu0 0.0
    %384 = vmatpush1.msra.mxu0 0.0
    %385 = vmatprep.subr.mxu0 0.0
    %386 = vmatpush1.msra.mxu0 0.0
    %387 = vmatprep.subr.mxu0 0.0
    %388 = vmatpush1.msra.mxu0 0.0
    %389 = vmatprep.subr.mxu0 0.0
    %390 = vmatpush1.msra.mxu0 0.0
    %391 = vmatprep.subr.mxu0 0.0
    %392 = vmatpush1.msra.mxu0 0.0
    %393 = vmatprep.subr.mxu0 0.0
    %394 = vmatpush1.msra.mxu0 0.0
    %395 = vmatprep.subr.mxu0 0.0
    %396 = vmatpush1.msra.mxu0 0.0
    %397 = vmatprep.subr.mxu0 0.0
    %398 = vmatpush1.msra.mxu0 0.0
    %399 = vmatprep.subr.mxu0 0.0
    %400 = vmatpush1.msra.mxu0 0.0
    %401 = vmatprep.subr.mxu0 0.0
    %402 = vmatpush1.msra.mxu0 0.0
    %403 = vmatprep.subr.mxu0 0.0
    %404 = vmatpush1.msra.mxu0 0.0
    %405 = vmatprep.subr.mxu0 0.0
    %406 = vmatpush1.msra.mxu0 0.0
    %407 = vmatprep.subr.mxu0 0.0
    %408 = vmatpush1.msra.mxu0 0.0
    %409 = vmatprep.subr.mxu0 0.0
    %410 = vmatpush1.msra.mxu0 0.0
    %411 = vmatprep.subr.mxu0 0.0
    %412 = vmatpush1.msra.mxu0 0.0
    %413 = vmatprep.subr.mxu0 0.0
    %414 = vmatpush1.msra.mxu0 0.0
    %415 = vmatprep.subr.mxu0 0.0
    %416 = vmatpush1.msra.mxu0 0.0
    %417 = vmatprep.mubr.f32.mxu0 0.0
    %418 = vmatmul.mubr.f32.gmra.mrb[0].mxu0 %v113
    %v419 = vpop.f32.mrb[0].mxu0
    %v420 = vadd.f32 %v98, %v419
    %v421 = vpop.f32.mrb[0].mxu0
    %v422 = vadd.f32 %v102, %v421
    %423 = vdwg.mxu0
    %v424 = vmax.f32 %v207, 0.0
    %v425 = vmax.f32 %v209, 0.0
    %v426 = vmax.f32 %v278, 0.0
    %v427 = vmax.f32 %v280, 0.0
    %v428 = vmax.f32 %v349, 0.0
    %v429 = vmax.f32 %v351, 0.0
    %v430 = vmax.f32 %v420, 0.0
    %v431 = vmax.f32 %v422, 0.0
    %v432 = vld [vmem:[#allocation2] sm:$0xff]
    %v433 = vld [vmem:[#allocation2 + $0x8] sm:$0xff]
    %v434 = vld [vmem:[#allocation2 + $0x10] sm:$0xff]
    %v435 = vld [vmem:[#allocation2 + $0x18] sm:$0xff]
    %v436 = vld [vmem:[#allocation2 + $0x20] sm:$0xff]
    %v437 = vld [vmem:[#allocation2 + $0x28] sm:$0xff]
    %v438 = vld [vmem:[#allocation2 + $0x30] sm:$0xff]
    %v439 = vld [vmem:[#allocation2 + $0x38] sm:$0xff]
    %v440 = vld [vmem:[#allocation2 + $0x40] sm:$0xff]
    %v441 = vld [vmem:[#allocation2 + $0x48] sm:$0xff]
    %v442 = vld [vmem:[#allocation2 + $0x50] sm:$0xff]
    %v443 = vld [vmem:[#allocation2 + $0x58] sm:$0xff]
    %v444 = vld [vmem:[#allocation2 + $0x60] sm:$0xff]
    %v445 = vld [vmem:[#allocation2 + $0x68] sm:$0xff]
    %v446 = vld [vmem:[#allocation2 + $0x70] sm:$0xff]
    %v447 = vld [vmem:[#allocation2 + $0x78] sm:$0xff]
    %v448 = vld [vmem:[#allocation2 + $0x80] sm:$0xff]
    %v449 = vld [vmem:[#allocation2 + $0x88] sm:$0xff]
    %v450 = vld [vmem:[#allocation2 + $0x90] sm:$0xff]
    %v451 = vld [vmem:[#allocation2 + $0x98] sm:$0xff]
    %v452 = vld [vmem:[#allocation2 + $0xa0] sm:$0xff]
    %v453 = vld [vmem:[#allocation2 + $0xa8] sm:$0xff]
    %v454 = vld [vmem:[#allocation2 + $0xb0] sm:$0xff]
    %v455 = vld [vmem:[#allocation2 + $0xb8] sm:$0xff]
    %v456 = vld [vmem:[#allocation2 + $0xc0] sm:$0xff]
    %v457 = vld [vmem:[#allocation2 + $0xc8] sm:$0xff]
    %v458 = vld [vmem:[#allocation2 + $0xd0] sm:$0xff]
    %v459 = vld [vmem:[#allocation2 + $0xd8] sm:$0xff]
    %v460 = vld [vmem:[#allocation2 + $0xe0] sm:$0xff]
    %v461 = vld [vmem:[#allocation2 + $0xe8] sm:$0xff]
    %v462 = vld [vmem:[#allocation2 + $0xf0] sm:$0xff]
    %v463 = vld [vmem:[#allocation2 + $0xf8] sm:$0xff]
    %v464 = vld [vmem:[#allocation2 + $0x100] sm:$0xff]
    %v465 = vld [vmem:[#allocation2 + $0x108] sm:$0xff]
    %v466 = vld [vmem:[#allocation2 + $0x110] sm:$0xff]
    %v467 = vld [vmem:[#allocation2 + $0x118] sm:$0xff]
    %v468 = vld [vmem:[#allocation2 + $0x120] sm:$0xff]
    %v469 = vld [vmem:[#allocation2 + $0x128] sm:$0xff]
    %v470 = vld [vmem:[#allocation2 + $0x130] sm:$0xff]
    %v471 = vld [vmem:[#allocation2 + $0x138] sm:$0xff]
    %v472 = vld [vmem:[#allocation2 + $0x140] sm:$0xff]
    %v473 = vld [vmem:[#allocation2 + $0x148] sm:$0xff]
    %v474 = vld [vmem:[#allocation2 + $0x150] sm:$0xff]
    %v475 = vld [vmem:[#allocation2 + $0x158] sm:$0xff]
    %v476 = vld [vmem:[#allocation2 + $0x160] sm:$0xff]
    %v477 = vld [vmem:[#allocation2 + $0x168] sm:$0xff]
    %v478 = vld [vmem:[#allocation2 + $0x170] sm:$0xff]
    %v479 = vld [vmem:[#allocation2 + $0x178] sm:$0xff]
    %v480 = vld [vmem:[#allocation2 + $0x180] sm:$0xff]
    %v481 = vld [vmem:[#allocation2 + $0x188] sm:$0xff]
    %v482 = vld [vmem:[#allocation2 + $0x190] sm:$0xff]
    %v483 = vld [vmem:[#allocation2 + $0x198] sm:$0xff]
    %v484 = vld [vmem:[#allocation2 + $0x1a0] sm:$0xff]
    %v485 = vld [vmem:[#allocation2 + $0x1a8] sm:$0xff]
    %v486 = vld [vmem:[#allocation2 + $0x1b0] sm:$0xff]
    %v487 = vld [vmem:[#allocation2 + $0x1b8] sm:$0xff]
    %v488 = vld [vmem:[#allocation2 + $0x1c0] sm:$0xff]
    %v489 = vld [vmem:[#allocation2 + $0x1c8] sm:$0xff]
    %v490 = vld [vmem:[#allocation2 + $0x1d0] sm:$0xff]
    %v491 = vld [vmem:[#allocation2 + $0x1d8] sm:$0xff]
    %v492 = vld [vmem:[#allocation2 + $0x1e0] sm:$0xff]
    %v493 = vld [vmem:[#allocation2 + $0x1e8] sm:$0xff]
    %v494 = vld [vmem:[#allocation2 + $0x1f0] sm:$0xff]
    %v495 = vld [vmem:[#allocation2 + $0x1f8] sm:$0xff]
    %v496 = vld [vmem:[#allocation2 + $0x200] sm:$0xff]
    %v497 = vld [vmem:[#allocation2 + $0x208] sm:$0xff]
    %v498 = vld [vmem:[#allocation2 + $0x210] sm:$0xff]
    %v499 = vld [vmem:[#allocation2 + $0x218] sm:$0xff]
    %v500 = vld [vmem:[#allocation2 + $0x220] sm:$0xff]
    %v501 = vld [vmem:[#allocation2 + $0x228] sm:$0xff]
    %v502 = vld [vmem:[#allocation2 + $0x230] sm:$0xff]
    %v503 = vld [vmem:[#allocation2 + $0x238] sm:$0xff]
    %v504 = vld [vmem:[#allocation2 + $0x240] sm:$0xff]
    %v505 = vld [vmem:[#allocation2 + $0x248] sm:$0xff]
    %v506 = vld [vmem:[#allocation2 + $0x250] sm:$0xff]
    %v507 = vld [vmem:[#allocation2 + $0x258] sm:$0xff]
    %v508 = vld [vmem:[#allocation2 + $0x260] sm:$0xff]
    %v509 = vld [vmem:[#allocation2 + $0x268] sm:$0xff]
    %v510 = vld [vmem:[#allocation2 + $0x270] sm:$0xff]
    %v511 = vld [vmem:[#allocation2 + $0x278] sm:$0xff]
    %v512 = vld [vmem:[#allocation2 + $0x280] sm:$0xff]
    %v513 = vld [vmem:[#allocation2 + $0x288] sm:$0xff]
    %v514 = vld [vmem:[#allocation2 + $0x290] sm:$0xff]
    %v515 = vld [vmem:[#allocation2 + $0x298] sm:$0xff]
    %v516 = vld [vmem:[#allocation2 + $0x2a0] sm:$0xff]
    %v517 = vld [vmem:[#allocation2 + $0x2a8] sm:$0xff]
    %v518 = vld [vmem:[#allocation2 + $0x2b0] sm:$0xff]
    %v519 = vld [vmem:[#allocation2 + $0x2b8] sm:$0xff]
    %v520 = vld [vmem:[#allocation2 + $0x2c0] sm:$0xff]
    %v521 = vld [vmem:[#allocation2 + $0x2c8] sm:$0xff]
    %v522 = vld [vmem:[#allocation2 + $0x2d0] sm:$0xff]
    %v523 = vld [vmem:[#allocation2 + $0x2d8] sm:$0xff]
    %v524 = vld [vmem:[#allocation2 + $0x2e0] sm:$0xff]
    %v525 = vld [vmem:[#allocation2 + $0x2e8] sm:$0xff]
    %v526 = vld [vmem:[#allocation2 + $0x2f0] sm:$0xff]
    %v527 = vld [vmem:[#allocation2 + $0x2f8] sm:$0xff]
    %v528 = vld [vmem:[#allocation2 + $0x300] sm:$0xff]
    %v529 = vld [vmem:[#allocation2 + $0x308] sm:$0xff]
    %v530 = vld [vmem:[#allocation2 + $0x310] sm:$0xff]
    %v531 = vld [vmem:[#allocation2 + $0x318] sm:$0xff]
    %v532 = vld [vmem:[#allocation2 + $0x320] sm:$0xff]
    %v533 = vld [vmem:[#allocation2 + $0x328] sm:$0xff]
    %v534 = vld [vmem:[#allocation2 + $0x330] sm:$0xff]
    %v535 = vld [vmem:[#allocation2 + $0x338] sm:$0xff]
    %v536 = vld [vmem:[#allocation2 + $0x340] sm:$0xff]
    %v537 = vld [vmem:[#allocation2 + $0x348] sm:$0xff]
    %v538 = vld [vmem:[#allocation2 + $0x350] sm:$0xff]
    %v539 = vld [vmem:[#allocation2 + $0x358] sm:$0xff]
    %v540 = vld [vmem:[#allocation2 + $0x360] sm:$0xff]
    %v541 = vld [vmem:[#allocation2 + $0x368] sm:$0xff]
    %v542 = vld [vmem:[#allocation2 + $0x370] sm:$0xff]
    %v543 = vld [vmem:[#allocation2 + $0x378] sm:$0xff]
    %v544 = vld [vmem:[#allocation2 + $0x380] sm:$0xff]
    %v545 = vld [vmem:[#allocation2 + $0x388] sm:$0xff]
    %v546 = vld [vmem:[#allocation2 + $0x390] sm:$0xff]
    %v547 = vld [vmem:[#allocation2 + $0x398] sm:$0xff]
    %v548 = vld [vmem:[#allocation2 + $0x3a0] sm:$0xff]
    %v549 = vld [vmem:[#allocation2 + $0x3a8] sm:$0xff]
    %v550 = vld [vmem:[#allocation2 + $0x3b0] sm:$0xff]
    %v551 = vld [vmem:[#allocation2 + $0x3b8] sm:$0xff]
    %v552 = vld [vmem:[#allocation2 + $0x3c0] sm:$0xff]
    %v553 = vld [vmem:[#allocation2 + $0x3c8] sm:$0xff]
    %v554 = vld [vmem:[#allocation2 + $0x3d0] sm:$0xff]
    %v555 = vld [vmem:[#allocation2 + $0x3d8] sm:$0xff]
    %v556 = vld [vmem:[#allocation2 + $0x3e0] sm:$0xff]
    %v557 = vld [vmem:[#allocation2 + $0x3e8] sm:$0xff]
    %v558 = vld [vmem:[#allocation2 + $0x3f0] sm:$0xff]
    %v559 = vld [vmem:[#allocation2 + $0x3f8] sm:$0xff]
    %v560 = vld [vmem:[#allocation2 + $0x400] sm:$0xff]
    %v561 = vld [vmem:[#allocation2 + $0x408] sm:$0xff]
    %v562 = vld [vmem:[#allocation2 + $0x410] sm:$0xff]
    %v563 = vld [vmem:[#allocation2 + $0x418] sm:$0xff]
    %v564 = vld [vmem:[#allocation2 + $0x420] sm:$0xff]
    %v565 = vld [vmem:[#allocation2 + $0x428] sm:$0xff]
    %v566 = vld [vmem:[#allocation2 + $0x430] sm:$0xff]
    %v567 = vld [vmem:[#allocation2 + $0x438] sm:$0xff]
    %v568 = vld [vmem:[#allocation2 + $0x440] sm:$0xff]
    %v569 = vld [vmem:[#allocation2 + $0x448] sm:$0xff]
    %v570 = vld [vmem:[#allocation2 + $0x450] sm:$0xff]
    %v571 = vld [vmem:[#allocation2 + $0x458] sm:$0xff]
    %v572 = vld [vmem:[#allocation2 + $0x460] sm:$0xff]
    %v573 = vld [vmem:[#allocation2 + $0x468] sm:$0xff]
    %v574 = vld [vmem:[#allocation2 + $0x470] sm:$0xff]
    %v575 = vld [vmem:[#allocation2 + $0x478] sm:$0xff]
    %v576 = vld [vmem:[#allocation2 + $0x480] sm:$0xff]
    %v577 = vld [vmem:[#allocation2 + $0x488] sm:$0xff]
    %v578 = vld [vmem:[#allocation2 + $0x490] sm:$0xff]
    %v579 = vld [vmem:[#allocation2 + $0x498] sm:$0xff]
    %v580 = vld [vmem:[#allocation2 + $0x4a0] sm:$0xff]
    %v581 = vld [vmem:[#allocation2 + $0x4a8] sm:$0xff]
    %v582 = vld [vmem:[#allocation2 + $0x4b0] sm:$0xff]
    %v583 = vld [vmem:[#allocation2 + $0x4b8] sm:$0xff]
    %v584 = vld [vmem:[#allocation2 + $0x4c0] sm:$0xff]
    %v585 = vld [vmem:[#allocation2 + $0x4c8] sm:$0xff]
    %v586 = vld [vmem:[#allocation2 + $0x4d0] sm:$0xff]
    %v587 = vld [vmem:[#allocation2 + $0x4d8] sm:$0xff]
    %v588 = vld [vmem:[#allocation2 + $0x4e0] sm:$0xff]
    %v589 = vld [vmem:[#allocation2 + $0x4e8] sm:$0xff]
    %v590 = vld [vmem:[#allocation2 + $0x4f0] sm:$0xff]
    %v591 = vld [vmem:[#allocation2 + $0x4f8] sm:$0xff]
    %v592 = vld [vmem:[#allocation2 + $0x500] sm:$0xff]
    %v593 = vld [vmem:[#allocation2 + $0x508] sm:$0xff]
    %v594 = vld [vmem:[#allocation2 + $0x510] sm:$0xff]
    %v595 = vld [vmem:[#allocation2 + $0x518] sm:$0xff]
    %v596 = vld [vmem:[#allocation2 + $0x520] sm:$0xff]
    %v597 = vld [vmem:[#allocation2 + $0x528] sm:$0xff]
    %v598 = vld [vmem:[#allocation2 + $0x530] sm:$0xff]
    %v599 = vld [vmem:[#allocation2 + $0x538] sm:$0xff]
    %v600 = vld [vmem:[#allocation2 + $0x540] sm:$0xff]
    %v601 = vld [vmem:[#allocation2 + $0x548] sm:$0xff]
    %v602 = vld [vmem:[#allocation2 + $0x550] sm:$0xff]
    %v603 = vld [vmem:[#allocation2 + $0x558] sm:$0xff]
    %v604 = vld [vmem:[#allocation2 + $0x560] sm:$0xff]
    %v605 = vld [vmem:[#allocation2 + $0x568] sm:$0xff]
    %v606 = vld [vmem:[#allocation2 + $0x570] sm:$0xff]
    %v607 = vld [vmem:[#allocation2 + $0x578] sm:$0xff]
    %v608 = vld [vmem:[#allocation2 + $0x580] sm:$0xff]
    %v609 = vld [vmem:[#allocation2 + $0x588] sm:$0xff]
    %v610 = vld [vmem:[#allocation2 + $0x590] sm:$0xff]
    %v611 = vld [vmem:[#allocation2 + $0x598] sm:$0xff]
    %v612 = vld [vmem:[#allocation2 + $0x5a0] sm:$0xff]
    %v613 = vld [vmem:[#allocation2 + $0x5a8] sm:$0xff]
    %v614 = vld [vmem:[#allocation2 + $0x5b0] sm:$0xff]
    %v615 = vld [vmem:[#allocation2 + $0x5b8] sm:$0xff]
    %v616 = vld [vmem:[#allocation2 + $0x5c0] sm:$0xff]
    %v617 = vld [vmem:[#allocation2 + $0x5c8] sm:$0xff]
    %v618 = vld [vmem:[#allocation2 + $0x5d0] sm:$0xff]
    %v619 = vld [vmem:[#allocation2 + $0x5d8] sm:$0xff]
    %v620 = vld [vmem:[#allocation2 + $0x5e0] sm:$0xff]
    %v621 = vld [vmem:[#allocation2 + $0x5e8] sm:$0xff]
    %v622 = vld [vmem:[#allocation2 + $0x5f0] sm:$0xff]
    %v623 = vld [vmem:[#allocation2 + $0x5f8] sm:$0xff]
    %v624 = vld [vmem:[%s4] sm:$0x7]
    %v626 = vlaneseq
    %v627 = vshrl.u32 %v626, 7
    %v628 = vsub.s32 0, %v627
    %v629 = vrot.slane %v624, %v628
    %v630 = vlaneseq
    %v631 = vshrl.u32 %v630, 7
    %v632 = vsub.s32 1, %v631
    %v633 = vrot.slane %v624, %v632
    %v634 = vlaneseq
    %v635 = vshrl.u32 %v634, 7
    %v636 = vsub.s32 2, %v635
    %v637 = vrot.slane %v624, %v636
    %641 = vmatprep.subr.mxu0 %v433
    %642 = vmatpush1.msra.mxu0 %v432
    %643 = vmatprep.subr.mxu0 %v436
    %644 = vmatpush1.msra.mxu0 %v435
    %645 = vmatprep.subr.mxu0 %v439
    %646 = vmatpush1.msra.mxu0 %v438
    %647 = vmatprep.subr.mxu0 %v442
    %648 = vmatpush1.msra.mxu0 %v441
    %649 = vmatprep.subr.mxu0 %v445
    %650 = vmatpush1.msra.mxu0 %v444
    %651 = vmatprep.subr.mxu0 %v448
    %652 = vmatpush1.msra.mxu0 %v447
    %653 = vmatprep.subr.mxu0 %v451
    %654 = vmatpush1.msra.mxu0 %v450
    %655 = vmatprep.subr.mxu0 %v454
    %656 = vmatpush1.msra.mxu0 %v453
    %657 = vmatprep.subr.mxu0 %v457
    %658 = vmatpush1.msra.mxu0 %v456
    %659 = vmatprep.subr.mxu0 %v460
    %660 = vmatpush1.msra.mxu0 %v459
    %661 = vmatprep.subr.mxu0 %v463
    %662 = vmatpush1.msra.mxu0 %v462
    %663 = vmatprep.subr.mxu0 %v466
    %664 = vmatpush1.msra.mxu0 %v465
    %665 = vmatprep.subr.mxu0 %v469
    %666 = vmatpush1.msra.mxu0 %v468
    %667 = vmatprep.subr.mxu0 %v472
    %668 = vmatpush1.msra.mxu0 %v471
    %669 = vmatprep.subr.mxu0 %v475
    %670 = vmatpush1.msra.mxu0 %v474
    %671 = vmatprep.subr.mxu0 %v478
    %672 = vmatpush1.msra.mxu0 %v477
    %673 = vmatprep.subr.mxu0 %v481
    %674 = vmatpush1.msra.mxu0 %v480
    %675 = vmatprep.subr.mxu0 %v484
    %676 = vmatpush1.msra.mxu0 %v483
    %677 = vmatprep.subr.mxu0 %v487
    %678 = vmatpush1.msra.mxu0 %v486
    %679 = vmatprep.subr.mxu0 %v490
    %680 = vmatpush1.msra.mxu0 %v489
    %681 = vmatprep.subr.mxu0 %v493
    %682 = vmatpush1.msra.mxu0 %v492
    %683 = vmatprep.subr.mxu0 %v496
    %684 = vmatpush1.msra.mxu0 %v495
    %685 = vmatprep.subr.mxu0 %v499
    %686 = vmatpush1.msra.mxu0 %v498
    %687 = vmatprep.subr.mxu0 %v502
    %688 = vmatpush1.msra.mxu0 %v501
    %689 = vmatprep.subr.mxu0 %v505
    %690 = vmatpush1.msra.mxu0 %v504
    %691 = vmatprep.subr.mxu0 %v508
    %692 = vmatpush1.msra.mxu0 %v507
    %693 = vmatprep.subr.mxu0 %v511
    %694 = vmatpush1.msra.mxu0 %v510
    %695 = vmatprep.subr.mxu0 %v514
    %696 = vmatpush1.msra.mxu0 %v513
    %697 = vmatprep.subr.mxu0 %v517
    %698 = vmatpush1.msra.mxu0 %v516
    %699 = vmatprep.subr.mxu0 %v520
    %700 = vmatpush1.msra.mxu0 %v519
    %701 = vmatprep.subr.mxu0 %v523
    %702 = vmatpush1.msra.mxu0 %v522
    %703 = vmatprep.subr.mxu0 %v526
    %704 = vmatpush1.msra.mxu0 %v525
    %705 = vmatprep.mubr.f32.mxu0 %v425
    %706 = vmatmul.mubr.f32.gmra.mrb[0].mxu0 %v424
    %v707 = vpop.f32.mrb[0].mxu0
    %v708 = vadd.f32 %v629, %v707
    %v709 = vpop.f32.mrb[0].mxu0
    %v710 = vadd.f32 %v633, %v709
    %711 = vdwg.mxu0
    %712 = vmatprep.subr.mxu0 %v529
    %713 = vmatpush1.msra.mxu0 %v528
    %714 = vmatprep.subr.mxu0 %v532
    %715 = vmatpush1.msra.mxu0 %v531
    %716 = vmatprep.subr.mxu0 %v535
    %717 = vmatpush1.msra.mxu0 %v534
    %718 = vmatprep.subr.mxu0 %v538
    %719 = vmatpush1.msra.mxu0 %v537
    %720 = vmatprep.subr.mxu0 %v541
    %721 = vmatpush1.msra.mxu0 %v540
    %722 = vmatprep.subr.mxu0 %v544
    %723 = vmatpush1.msra.mxu0 %v543
    %724 = vmatprep.subr.mxu0 %v547
    %725 = vmatpush1.msra.mxu0 %v546
    %726 = vmatprep.subr.mxu0 %v550
    %727 = vmatpush1.msra.mxu0 %v549
    %728 = vmatprep.subr.mxu0 %v553
    %729 = vmatpush1.msra.mxu0 %v552
    %730 = vmatprep.subr.mxu0 %v556
    %731 = vmatpush1.msra.mxu0 %v555
    %732 = vmatprep.subr.mxu0 %v559
    %733 = vmatpush1.msra.mxu0 %v558
    %734 = vmatprep.subr.mxu0 %v562
    %735 = vmatpush1.msra.mxu0 %v561
    %736 = vmatprep.subr.mxu0 %v565
    %737 = vmatpush1.msra.mxu0 %v564
    %738 = vmatprep.subr.mxu0 %v568
    %739 = vmatpush1.msra.mxu0 %v567
    %740 = vmatprep.subr.mxu0 %v571
    %741 = vmatpush1.msra.mxu0 %v570
    %742 = vmatprep.subr.mxu0 %v574
    %743 = vmatpush1.msra.mxu0 %v573
    %744 = vmatprep.subr.mxu0 %v577
    %745 = vmatpush1.msra.mxu0 %v576
    %746 = vmatprep.subr.mxu0 %v580
    %747 = vmatpush1.msra.mxu0 %v579
    %748 = vmatprep.subr.mxu0 %v583
    %749 = vmatpush1.msra.mxu0 %v582
    %750 = vmatprep.subr.mxu0 %v586
    %751 = vmatpush1.msra.mxu0 %v585
    %752 = vmatprep.subr.mxu0 %v589
    %753 = vmatpush1.msra.mxu0 %v588
    %754 = vmatprep.subr.mxu0 %v592
    %755 = vmatpush1.msra.mxu0 %v591
    %756 = vmatprep.subr.mxu0 %v595
    %757 = vmatpush1.msra.mxu0 %v594
    %758 = vmatprep.subr.mxu0 %v598
    %759 = vmatpush1.msra.mxu0 %v597
    %760 = vmatprep.subr.mxu0 %v601
    %761 = vmatpush1.msra.mxu0 %v600
    %762 = vmatprep.subr.mxu0 %v604
    %763 = vmatpush1.msra.mxu0 %v603
    %764 = vmatprep.subr.mxu0 %v607
    %765 = vmatpush1.msra.mxu0 %v606
    %766 = vmatprep.subr.mxu0 %v610
    %767 = vmatpush1.msra.mxu0 %v609
    %768 = vmatprep.subr.mxu0 %v613
    %769 = vmatpush1.msra.mxu0 %v612
    %770 = vmatprep.subr.mxu0 %v616
    %771 = vmatpush1.msra.mxu0 %v615
    %772 = vmatprep.subr.mxu0 %v619
    %773 = vmatpush1.msra.mxu0 %v618
    %774 = vmatprep.subr.mxu0 %v622
    %775 = vmatpush1.msra.mxu0 %v621
    %776 = vmatprep.mubr.f32.mxu0 %v427
    %777 = vmatmul.mubr.f32.gmra.mrb[0].mxu0 %v426
    %v778 = vpop.f32.mrb[0].mxu0
    %v779 = vadd.f32 %v708, %v778
    %v780 = vpop.f32.mrb[0].mxu0
    %v781 = vadd.f32 %v710, %v780
    %782 = vdwg.mxu0
    %783 = vmatprep.subr.mxu0 0.0
    %784 = vmatpush1.msra.mxu0 %v434
    %785 = vmatprep.subr.mxu0 0.0
    %786 = vmatpush1.msra.mxu0 %v437
    %787 = vmatprep.subr.mxu0 0.0
    %788 = vmatpush1.msra.mxu0 %v440
    %789 = vmatprep.subr.mxu0 0.0
    %790 = vmatpush1.msra.mxu0 %v443
    %791 = vmatprep.subr.mxu0 0.0
    %792 = vmatpush1.msra.mxu0 %v446
    %793 = vmatprep.subr.mxu0 0.0
    %794 = vmatpush1.msra.mxu0 %v449
    %795 = vmatprep.subr.mxu0 0.0
    %796 = vmatpush1.msra.mxu0 %v452
    %797 = vmatprep.subr.mxu0 0.0
    %798 = vmatpush1.msra.mxu0 %v455
    %799 = vmatprep.subr.mxu0 0.0
    %800 = vmatpush1.msra.mxu0 %v458
    %801 = vmatprep.subr.mxu0 0.0
    %802 = vmatpush1.msra.mxu0 %v461
    %803 = vmatprep.subr.mxu0 0.0
    %804 = vmatpush1.msra.mxu0 %v464
    %805 = vmatprep.subr.mxu0 0.0
    %806 = vmatpush1.msra.mxu0 %v467
    %807 = vmatprep.subr.mxu0 0.0
    %808 = vmatpush1.msra.mxu0 %v470
    %809 = vmatprep.subr.mxu0 0.0
    %810 = vmatpush1.msra.mxu0 %v473
    %811 = vmatprep.subr.mxu0 0.0
    %812 = vmatpush1.msra.mxu0 %v476
    %813 = vmatprep.subr.mxu0 0.0
    %814 = vmatpush1.msra.mxu0 %v479
    %815 = vmatprep.subr.mxu0 0.0
    %816 = vmatpush1.msra.mxu0 %v482
    %817 = vmatprep.subr.mxu0 0.0
    %818 = vmatpush1.msra.mxu0 %v485
    %819 = vmatprep.subr.mxu0 0.0
    %820 = vmatpush1.msra.mxu0 %v488
    %821 = vmatprep.subr.mxu0 0.0
    %822 = vmatpush1.msra.mxu0 %v491
    %823 = vmatprep.subr.mxu0 0.0
    %824 = vmatpush1.msra.mxu0 %v494
    %825 = vmatprep.subr.mxu0 0.0
    %826 = vmatpush1.msra.mxu0 %v497
    %827 = vmatprep.subr.mxu0 0.0
    %828 = vmatpush1.msra.mxu0 %v500
    %829 = vmatprep.subr.mxu0 0.0
    %830 = vmatpush1.msra.mxu0 %v503
    %831 = vmatprep.subr.mxu0 0.0
    %832 = vmatpush1.msra.mxu0 %v506
    %833 = vmatprep.subr.mxu0 0.0
    %834 = vmatpush1.msra.mxu0 %v509
    %835 = vmatprep.subr.mxu0 0.0
    %836 = vmatpush1.msra.mxu0 %v512
    %837 = vmatprep.subr.mxu0 0.0
    %838 = vmatpush1.msra.mxu0 %v515
    %839 = vmatprep.subr.mxu0 0.0
    %840 = vmatpush1.msra.mxu0 %v518
    %841 = vmatprep.subr.mxu0 0.0
    %842 = vmatpush1.msra.mxu0 %v521
    %843 = vmatprep.subr.mxu0 0.0
    %844 = vmatpush1.msra.mxu0 %v524
    %845 = vmatprep.subr.mxu0 0.0
    %846 = vmatpush1.msra.mxu0 %v527
    %847 = vmatprep.mubr.f32.mxu0 %v425
    %848 = vmatmul.mubr.f32.gmra.mrb[0].mxu0 %v424
    %v849 = vpop.f32.mrb[0].mxu0
    %v850 = vadd.f32 %v637, %v849
    %v851 = vpop.f32.mrb[0].mxu0
    %852 = vdwg.mxu0
    %853 = vmatprep.subr.mxu0 0.0
    %854 = vmatpush1.msra.mxu0 %v530
    %855 = vmatprep.subr.mxu0 0.0
    %856 = vmatpush1.msra.mxu0 %v533
    %857 = vmatprep.subr.mxu0 0.0
    %858 = vmatpush1.msra.mxu0 %v536
    %859 = vmatprep.subr.mxu0 0.0
    %860 = vmatpush1.msra.mxu0 %v539
    %861 = vmatprep.subr.mxu0 0.0
    %862 = vmatpush1.msra.mxu0 %v542
    %863 = vmatprep.subr.mxu0 0.0
    %864 = vmatpush1.msra.mxu0 %v545
    %865 = vmatprep.subr.mxu0 0.0
    %866 = vmatpush1.msra.mxu0 %v548
    %867 = vmatprep.subr.mxu0 0.0
    %868 = vmatpush1.msra.mxu0 %v551
    %869 = vmatprep.subr.mxu0 0.0
    %870 = vmatpush1.msra.mxu0 %v554
    %871 = vmatprep.subr.mxu0 0.0
    %872 = vmatpush1.msra.mxu0 %v557
    %873 = vmatprep.subr.mxu0 0.0
    %874 = vmatpush1.msra.mxu0 %v560
    %875 = vmatprep.subr.mxu0 0.0
    %876 = vmatpush1.msra.mxu0 %v563
    %877 = vmatprep.subr.mxu0 0.0
    %878 = vmatpush1.msra.mxu0 %v566
    %879 = vmatprep.subr.mxu0 0.0
    %880 = vmatpush1.msra.mxu0 %v569
    %881 = vmatprep.subr.mxu0 0.0
    %882 = vmatpush1.msra.mxu0 %v572
    %883 = vmatprep.subr.mxu0 0.0
    %884 = vmatpush1.msra.mxu0 %v575
    %885 = vmatprep.subr.mxu0 0.0
    %886 = vmatpush1.msra.mxu0 %v578
    %887 = vmatprep.subr.mxu0 0.0
    %888 = vmatpush1.msra.mxu0 %v581
    %889 = vmatprep.subr.mxu0 0.0
    %890 = vmatpush1.msra.mxu0 %v584
    %891 = vmatprep.subr.mxu0 0.0
    %892 = vmatpush1.msra.mxu0 %v587
    %893 = vmatprep.subr.mxu0 0.0
    %894 = vmatpush1.msra.mxu0 %v590
    %895 = vmatprep.subr.mxu0 0.0
    %896 = vmatpush1.msra.mxu0 %v593
    %897 = vmatprep.subr.mxu0 0.0
    %898 = vmatpush1.msra.mxu0 %v596
    %899 = vmatprep.subr.mxu0 0.0
    %900 = vmatpush1.msra.mxu0 %v599
    %901 = vmatprep.subr.mxu0 0.0
    %902 = vmatpush1.msra.mxu0 %v602
    %903 = vmatprep.subr.mxu0 0.0
    %904 = vmatpush1.msra.mxu0 %v605
    %905 = vmatprep.subr.mxu0 0.0
    %906 = vmatpush1.msra.mxu0 %v608
    %907 = vmatprep.subr.mxu0 0.0
    %908 = vmatpush1.msra.mxu0 %v611
    %909 = vmatprep.subr.mxu0 0.0
    %910 = vmatpush1.msra.mxu0 %v614
    %911 = vmatprep.subr.mxu0 0.0
    %912 = vmatpush1.msra.mxu0 %v617
    %913 = vmatprep.subr.mxu0 0.0
    %914 = vmatpush1.msra.mxu0 %v620
    %915 = vmatprep.subr.mxu0 0.0
    %916 = vmatpush1.msra.mxu0 %v623
    %917 = vmatprep.mubr.f32.mxu0 %v427
    %918 = vmatmul.mubr.f32.gmra.mrb[0].mxu0 %v426
    %v919 = vpop.f32.mrb[0].mxu0
    %v920 = vadd.f32 %v850, %v919
    %v921 = vpop.f32.mrb[0].mxu0
    %922 = vdwg.mxu0
    %v923 = vmax.f32 %v779, 0.0
    %v924 = vmax.f32 %v781, 0.0
    %v925 = vmax.f32 %v920, 0.0
    %v926 = vld [vmem:[#allocation4] sm:$0xff]
    %v927 = vld [vmem:[#allocation4 + $0x8] sm:$0xff]
    %v928 = vld [vmem:[#allocation4 + $0x10] sm:$0xff]
    %v929 = vld [vmem:[#allocation4 + $0x18] sm:$0xff]
    %v930 = vld [vmem:[#allocation4 + $0x20] sm:$0xff]
    %v931 = vld [vmem:[#allocation4 + $0x28] sm:$0xff]
    %v932 = vld [vmem:[#allocation4 + $0x30] sm:$0xff]
    %v933 = vld [vmem:[#allocation4 + $0x38] sm:$0xff]
    %v934 = vld [vmem:[#allocation4 + $0x40] sm:$0xff]
    %v935 = vld [vmem:[#allocation4 + $0x48] sm:$0xff]
    %v936 = vld [vmem:[#allocation4 + $0x50] sm:$0xff]
    %v937 = vld [vmem:[#allocation4 + $0x58] sm:$0xff]
    %v938 = vld [vmem:[#allocation4 + $0x60] sm:$0xff]
    %v939 = vld [vmem:[#allocation4 + $0x68] sm:$0xff]
    %v940 = vld [vmem:[#allocation4 + $0x70] sm:$0xff]
    %v941 = vld [vmem:[#allocation4 + $0x78] sm:$0xff]
    %v942 = vld [vmem:[#allocation4 + $0x80] sm:$0xff]
    %v943 = vld [vmem:[#allocation4 + $0x88] sm:$0xff]
    %v944 = vld [vmem:[#allocation4 + $0x90] sm:$0xff]
    %v945 = vld [vmem:[#allocation4 + $0x98] sm:$0xff]
    %v946 = vld [vmem:[#allocation4 + $0xa0] sm:$0xff]
    %v947 = vld [vmem:[#allocation4 + $0xa8] sm:$0xff]
    %v948 = vld [vmem:[#allocation4 + $0xb0] sm:$0xff]
    %v949 = vld [vmem:[#allocation4 + $0xb8] sm:$0xff]
    %v950 = vld [vmem:[#allocation4 + $0xc0] sm:$0xff]
    %v951 = vld [vmem:[#allocation4 + $0xc8] sm:$0xff]
    %v952 = vld [vmem:[#allocation4 + $0xd0] sm:$0xff]
    %v953 = vld [vmem:[#allocation4 + $0xd8] sm:$0xff]
    %v954 = vld [vmem:[#allocation4 + $0xe0] sm:$0xff]
    %v955 = vld [vmem:[#allocation4 + $0xe8] sm:$0xff]
    %v956 = vld [vmem:[#allocation4 + $0xf0] sm:$0xff]
    %v957 = vld [vmem:[#allocation4 + $0xf8] sm:$0xff]
    %v958 = vld [vmem:[#allocation4 + $0x100] sm:$0xff]
    %v959 = vld [vmem:[#allocation4 + $0x108] sm:$0xff]
    %v960 = vld [vmem:[#allocation4 + $0x110] sm:$0xff]
    %v961 = vld [vmem:[#allocation4 + $0x118] sm:$0xff]
    %v962 = vld [vmem:[#allocation4 + $0x120] sm:$0xff]
    %v963 = vld [vmem:[#allocation4 + $0x128] sm:$0xff]
    %v964 = vld [vmem:[#allocation4 + $0x130] sm:$0xff]
    %v965 = vld [vmem:[#allocation4 + $0x138] sm:$0xff]
    %v966 = vld [vmem:[#allocation4 + $0x140] sm:$0xff]
    %v967 = vld [vmem:[#allocation4 + $0x148] sm:$0xff]
    %v968 = vld [vmem:[#allocation4 + $0x150] sm:$0xff]
    %v969 = vld [vmem:[#allocation4 + $0x158] sm:$0xff]
    %v970 = vld [vmem:[#allocation4 + $0x160] sm:$0xff]
    %v971 = vld [vmem:[#allocation4 + $0x168] sm:$0xff]
    %v972 = vld [vmem:[#allocation4 + $0x170] sm:$0xff]
    %v973 = vld [vmem:[#allocation4 + $0x178] sm:$0xff]
    %v974 = vld [vmem:[#allocation4 + $0x180] sm:$0xff]
    %v975 = vld [vmem:[#allocation4 + $0x188] sm:$0xff]
    %v976 = vld [vmem:[#allocation4 + $0x190] sm:$0xff]
    %v977 = vld [vmem:[#allocation4 + $0x198] sm:$0xff]
    %v978 = vld [vmem:[#allocation4 + $0x1a0] sm:$0xff]
    %v979 = vld [vmem:[#allocation4 + $0x1a8] sm:$0xff]
    %v980 = vld [vmem:[#allocation4 + $0x1b0] sm:$0xff]
    %v981 = vld [vmem:[#allocation4 + $0x1b8] sm:$0xff]
    %v982 = vld [vmem:[#allocation4 + $0x1c0] sm:$0xff]
    %v983 = vld [vmem:[#allocation4 + $0x1c8] sm:$0xff]
    %v984 = vld [vmem:[#allocation4 + $0x1d0] sm:$0xff]
    %v985 = vld [vmem:[#allocation4 + $0x1d8] sm:$0xff]
    %v986 = vld [vmem:[#allocation4 + $0x1e0] sm:$0xff]
    %v987 = vld [vmem:[#allocation4 + $0x1e8] sm:$0xff]
    %v988 = vld [vmem:[#allocation4 + $0x1f0] sm:$0xff]
    %v989 = vld [vmem:[#allocation4 + $0x1f8] sm:$0xff]
    %v990 = vld [vmem:[#allocation4 + $0x200] sm:$0xff]
    %v991 = vld [vmem:[#allocation4 + $0x208] sm:$0xff]
    %v992 = vld [vmem:[#allocation4 + $0x210] sm:$0xff]
    %v993 = vld [vmem:[#allocation4 + $0x218] sm:$0xff]
    %v994 = vld [vmem:[#allocation4 + $0x220] sm:$0xff]
    %v995 = vld [vmem:[#allocation4 + $0x228] sm:$0xff]
    %v996 = vld [vmem:[#allocation4 + $0x230] sm:$0xff]
    %v997 = vld [vmem:[#allocation4 + $0x238] sm:$0xff]
    %v998 = vld [vmem:[#allocation4 + $0x240] sm:$0xff]
    %v999 = vld [vmem:[#allocation4 + $0x248] sm:$0xff]
    %v1000 = vld [vmem:[#allocation4 + $0x250] sm:$0xff]
    %v1001 = vld [vmem:[#allocation4 + $0x258] sm:$0xff]
    %v1002 = vld [vmem:[#allocation4 + $0x260] sm:$0xff]
    %v1003 = vld [vmem:[#allocation4 + $0x268] sm:$0xff]
    %v1004 = vld [vmem:[#allocation4 + $0x270] sm:$0xff]
    %v1005 = vld [vmem:[#allocation4 + $0x278] sm:$0xff]
    %v1006 = vld [vmem:[#allocation4 + $0x280] sm:$0xff]
    %v1007 = vld [vmem:[#allocation4 + $0x288] sm:$0xff]
    %v1008 = vld [vmem:[#allocation4 + $0x290] sm:$0xff]
    %v1009 = vld [vmem:[#allocation4 + $0x298] sm:$0xff]
    %v1010 = vld [vmem:[#allocation4 + $0x2a0] sm:$0xff]
    %v1011 = vld [vmem:[#allocation4 + $0x2a8] sm:$0xff]
    %v1012 = vld [vmem:[#allocation4 + $0x2b0] sm:$0xff]
    %v1013 = vld [vmem:[#allocation4 + $0x2b8] sm:$0xff]
    %v1014 = vld [vmem:[#allocation4 + $0x2c0] sm:$0xff]
    %v1015 = vld [vmem:[#allocation4 + $0x2c8] sm:$0xff]
    %v1016 = vld [vmem:[#allocation4 + $0x2d0] sm:$0xff]
    %v1017 = vld [vmem:[#allocation4 + $0x2d8] sm:$0xff]
    %v1018 = vld [vmem:[#allocation4 + $0x2e0] sm:$0xff]
    %v1019 = vld [vmem:[#allocation4 + $0x2e8] sm:$0xff]
    %v1020 = vld [vmem:[#allocation4 + $0x2f0] sm:$0xff]
    %v1021 = vld [vmem:[#allocation4 + $0x2f8] sm:$0xff]
    %v1022 = vld [vmem:[#allocation4 + $0x300] sm:$0xff]
    %v1023 = vld [vmem:[#allocation4 + $0x308] sm:$0xff]
    %v1024 = vld [vmem:[#allocation4 + $0x310] sm:$0xff]
    %v1025 = vld [vmem:[#allocation4 + $0x318] sm:$0xff]
    %v1026 = vld [vmem:[#allocation4 + $0x320] sm:$0xff]
    %v1027 = vld [vmem:[#allocation4 + $0x328] sm:$0xff]
    %v1028 = vld [vmem:[#allocation4 + $0x330] sm:$0xff]
    %v1029 = vld [vmem:[#allocation4 + $0x338] sm:$0xff]
    %v1030 = vld [vmem:[#allocation4 + $0x340] sm:$0xff]
    %v1031 = vld [vmem:[#allocation4 + $0x348] sm:$0xff]
    %v1032 = vld [vmem:[#allocation4 + $0x350] sm:$0xff]
    %v1033 = vld [vmem:[#allocation4 + $0x358] sm:$0xff]
    %v1034 = vld [vmem:[#allocation4 + $0x360] sm:$0xff]
    %v1035 = vld [vmem:[#allocation4 + $0x368] sm:$0xff]
    %v1036 = vld [vmem:[#allocation4 + $0x370] sm:$0xff]
    %v1037 = vld [vmem:[#allocation4 + $0x378] sm:$0xff]
    %v1038 = vld [vmem:[#allocation4 + $0x380] sm:$0xff]
    %v1039 = vld [vmem:[#allocation4 + $0x388] sm:$0xff]
    %v1040 = vld [vmem:[#allocation4 + $0x390] sm:$0xff]
    %v1041 = vld [vmem:[#allocation4 + $0x398] sm:$0xff]
    %v1042 = vld [vmem:[#allocation4 + $0x3a0] sm:$0xff]
    %v1043 = vld [vmem:[#allocation4 + $0x3a8] sm:$0xff]
    %v1044 = vld [vmem:[#allocation4 + $0x3b0] sm:$0xff]
    %v1045 = vld [vmem:[#allocation4 + $0x3b8] sm:$0xff]
    %v1046 = vld [vmem:[#allocation4 + $0x3c0] sm:$0xff]
    %v1047 = vld [vmem:[#allocation4 + $0x3c8] sm:$0xff]
    %v1048 = vld [vmem:[#allocation4 + $0x3d0] sm:$0xff]
    %v1049 = vld [vmem:[#allocation4 + $0x3d8] sm:$0xff]
    %v1050 = vld [vmem:[#allocation4 + $0x3e0] sm:$0xff]
    %v1051 = vld [vmem:[#allocation4 + $0x3e8] sm:$0xff]
    %v1052 = vld [vmem:[#allocation4 + $0x3f0] sm:$0xff]
    %v1053 = vld [vmem:[#allocation4 + $0x3f8] sm:$0xff]
    %v1054 = vld [vmem:[#allocation4 + $0x400] sm:$0xff]
    %v1055 = vld [vmem:[#allocation4 + $0x408] sm:$0xff]
    %v1056 = vld [vmem:[#allocation4 + $0x410] sm:$0xff]
    %v1057 = vld [vmem:[#allocation4 + $0x418] sm:$0xff]
    %v1058 = vld [vmem:[#allocation4 + $0x420] sm:$0xff]
    %v1059 = vld [vmem:[#allocation4 + $0x428] sm:$0xff]
    %v1060 = vld [vmem:[#allocation4 + $0x430] sm:$0xff]
    %v1061 = vld [vmem:[#allocation4 + $0x438] sm:$0xff]
    %v1062 = vld [vmem:[#allocation4 + $0x440] sm:$0xff]
    %v1063 = vld [vmem:[#allocation4 + $0x448] sm:$0xff]
    %v1064 = vld [vmem:[#allocation4 + $0x450] sm:$0xff]
    %v1065 = vld [vmem:[#allocation4 + $0x458] sm:$0xff]
    %v1066 = vld [vmem:[#allocation4 + $0x460] sm:$0xff]
    %v1067 = vld [vmem:[#allocation4 + $0x468] sm:$0xff]
    %v1068 = vld [vmem:[#allocation4 + $0x470] sm:$0xff]
    %v1069 = vld [vmem:[#allocation4 + $0x478] sm:$0xff]
    %v1070 = vld [vmem:[#allocation4 + $0x480] sm:$0xff]
    %v1071 = vld [vmem:[#allocation4 + $0x488] sm:$0xff]
    %v1072 = vld [vmem:[#allocation4 + $0x490] sm:$0xff]
    %v1073 = vld [vmem:[#allocation4 + $0x498] sm:$0xff]
    %v1074 = vld [vmem:[#allocation4 + $0x4a0] sm:$0xff]
    %v1075 = vld [vmem:[#allocation4 + $0x4a8] sm:$0xff]
    %v1076 = vld [vmem:[#allocation4 + $0x4b0] sm:$0xff]
    %v1077 = vld [vmem:[#allocation4 + $0x4b8] sm:$0xff]
    %v1078 = vld [vmem:[#allocation4 + $0x4c0] sm:$0xff]
    %v1079 = vld [vmem:[#allocation4 + $0x4c8] sm:$0xff]
    %v1080 = vld [vmem:[#allocation4 + $0x4d0] sm:$0xff]
    %v1081 = vld [vmem:[#allocation4 + $0x4d8] sm:$0xff]
    %v1082 = vld [vmem:[#allocation4 + $0x4e0] sm:$0xff]
    %v1083 = vld [vmem:[#allocation4 + $0x4e8] sm:$0xff]
    %v1084 = vld [vmem:[#allocation4 + $0x4f0] sm:$0xff]
    %v1085 = vld [vmem:[#allocation4 + $0x4f8] sm:$0xff]
    %v1086 = vld [vmem:[#allocation4 + $0x500] sm:$0xff]
    %v1087 = vld [vmem:[#allocation4 + $0x508] sm:$0xff]
    %v1088 = vld [vmem:[#allocation4 + $0x510] sm:$0xff]
    %v1089 = vld [vmem:[#allocation4 + $0x518] sm:$0xff]
    %v1090 = vld [vmem:[#allocation4 + $0x520] sm:$0xff]
    %v1091 = vld [vmem:[#allocation4 + $0x528] sm:$0xff]
    %v1092 = vld [vmem:[#allocation4 + $0x530] sm:$0xff]
    %v1093 = vld [vmem:[#allocation4 + $0x538] sm:$0xff]
    %v1094 = vld [vmem:[#allocation4 + $0x540] sm:$0xff]
    %v1095 = vld [vmem:[#allocation4 + $0x548] sm:$0xff]
    %v1096 = vld [vmem:[#allocation4 + $0x550] sm:$0xff]
    %v1097 = vld [vmem:[#allocation4 + $0x558] sm:$0xff]
    %v1098 = vld [vmem:[#allocation4 + $0x560] sm:$0xff]
    %v1099 = vld [vmem:[#allocation4 + $0x568] sm:$0xff]
    %v1100 = vld [vmem:[#allocation4 + $0x570] sm:$0xff]
    %v1101 = vld [vmem:[#allocation4 + $0x578] sm:$0xff]
    %v1102 = vld [vmem:[#allocation4 + $0x580] sm:$0xff]
    %v1103 = vld [vmem:[#allocation4 + $0x588] sm:$0xff]
    %v1104 = vld [vmem:[#allocation4 + $0x590] sm:$0xff]
    %v1105 = vld [vmem:[#allocation4 + $0x598] sm:$0xff]
    %v1106 = vld [vmem:[#allocation4 + $0x5a0] sm:$0xff]
    %v1107 = vld [vmem:[#allocation4 + $0x5a8] sm:$0xff]
    %v1108 = vld [vmem:[#allocation4 + $0x5b0] sm:$0xff]
    %v1109 = vld [vmem:[#allocation4 + $0x5b8] sm:$0xff]
    %v1110 = vld [vmem:[#allocation4 + $0x5c0] sm:$0xff]
    %v1111 = vld [vmem:[#allocation4 + $0x5c8] sm:$0xff]
    %v1112 = vld [vmem:[#allocation4 + $0x5d0] sm:$0xff]
    %v1113 = vld [vmem:[#allocation4 + $0x5d8] sm:$0xff]
    %v1114 = vld [vmem:[#allocation4 + $0x5e0] sm:$0xff]
    %v1115 = vld [vmem:[#allocation4 + $0x5e8] sm:$0xff]
    %v1116 = vld [vmem:[#allocation4 + $0x5f0] sm:$0xff]
    %v1117 = vld [vmem:[#allocation4 + $0x5f8] sm:$0xff]
    %v1118 = vld [vmem:[%s6] sm:$0x7]
    %v1120 = vlaneseq
    %v1121 = vshrl.u32 %v1120, 7
    %v1122 = vsub.s32 0, %v1121
    %v1123 = vrot.slane %v1118, %v1122
    %v1124 = vlaneseq
    %v1125 = vshrl.u32 %v1124, 7
    %v1126 = vsub.s32 1, %v1125
    %v1127 = vrot.slane %v1118, %v1126
    %v1128 = vlaneseq
    %v1129 = vshrl.u32 %v1128, 7
    %v1130 = vsub.s32 2, %v1129
    %v1131 = vrot.slane %v1118, %v1130
    %1135 = vmatprep.subr.mxu0 %v927
    %1136 = vmatpush1.msra.mxu0 %v926
    %1137 = vmatprep.subr.mxu0 %v930
    %1138 = vmatpush1.msra.mxu0 %v929
    %1139 = vmatprep.subr.mxu0 %v933
    %1140 = vmatpush1.msra.mxu0 %v932
    %1141 = vmatprep.subr.mxu0 %v936
    %1142 = vmatpush1.msra.mxu0 %v935
    %1143 = vmatprep.subr.mxu0 %v939
    %1144 = vmatpush1.msra.mxu0 %v938
    %1145 = vmatprep.subr.mxu0 %v942
    %1146 = vmatpush1.msra.mxu0 %v941
    %1147 = vmatprep.subr.mxu0 %v945
    %1148 = vmatpush1.msra.mxu0 %v944
    %1149 = vmatprep.subr.mxu0 %v948
    %1150 = vmatpush1.msra.mxu0 %v947
    %1151 = vmatprep.subr.mxu0 %v951
    %1152 = vmatpush1.msra.mxu0 %v950
    %1153 = vmatprep.subr.mxu0 %v954
    %1154 = vmatpush1.msra.mxu0 %v953
    %1155 = vmatprep.subr.mxu0 %v957
    %1156 = vmatpush1.msra.mxu0 %v956
    %1157 = vmatprep.subr.mxu0 %v960
    %1158 = vmatpush1.msra.mxu0 %v959
    %1159 = vmatprep.subr.mxu0 %v963
    %1160 = vmatpush1.msra.mxu0 %v962
    %1161 = vmatprep.subr.mxu0 %v966
    %1162 = vmatpush1.msra.mxu0 %v965
    %1163 = vmatprep.subr.mxu0 %v969
    %1164 = vmatpush1.msra.mxu0 %v968
    %1165 = vmatprep.subr.mxu0 %v972
    %1166 = vmatpush1.msra.mxu0 %v971
    %1167 = vmatprep.subr.mxu0 %v975
    %1168 = vmatpush1.msra.mxu0 %v974
    %1169 = vmatprep.subr.mxu0 %v978
    %1170 = vmatpush1.msra.mxu0 %v977
    %1171 = vmatprep.subr.mxu0 %v981
    %1172 = vmatpush1.msra.mxu0 %v980
    %1173 = vmatprep.subr.mxu0 %v984
    %1174 = vmatpush1.msra.mxu0 %v983
    %1175 = vmatprep.subr.mxu0 %v987
    %1176 = vmatpush1.msra.mxu0 %v986
    %1177 = vmatprep.subr.mxu0 %v990
    %1178 = vmatpush1.msra.mxu0 %v989
    %1179 = vmatprep.subr.mxu0 %v993
    %1180 = vmatpush1.msra.mxu0 %v992
    %1181 = vmatprep.subr.mxu0 %v996
    %1182 = vmatpush1.msra.mxu0 %v995
    %1183 = vmatprep.subr.mxu0 %v999
    %1184 = vmatpush1.msra.mxu0 %v998
    %1185 = vmatprep.subr.mxu0 %v1002
    %1186 = vmatpush1.msra.mxu0 %v1001
    %1187 = vmatprep.subr.mxu0 %v1005
    %1188 = vmatpush1.msra.mxu0 %v1004
    %1189 = vmatprep.subr.mxu0 %v1008
    %1190 = vmatpush1.msra.mxu0 %v1007
    %1191 = vmatprep.subr.mxu0 %v1011
    %1192 = vmatpush1.msra.mxu0 %v1010
    %1193 = vmatprep.subr.mxu0 %v1014
    %1194 = vmatpush1.msra.mxu0 %v1013
    %1195 = vmatprep.subr.mxu0 %v1017
    %1196 = vmatpush1.msra.mxu0 %v1016
    %1197 = vmatprep.subr.mxu0 %v1020
    %1198 = vmatpush1.msra.mxu0 %v1019
    %1199 = vmatprep.mubr.f32.mxu0 %v429
    %1200 = vmatmul.mubr.f32.gmra.mrb[0].mxu0 %v428
    %v1201 = vpop.f32.mrb[0].mxu0
    %v1202 = vadd.f32 %v1123, %v1201
    %v1203 = vpop.f32.mrb[0].mxu0
    %v1204 = vadd.f32 %v1127, %v1203
    %1205 = vdwg.mxu0
    %1206 = vmatprep.subr.mxu0 %v1023
    %1207 = vmatpush1.msra.mxu0 %v1022
    %1208 = vmatprep.subr.mxu0 %v1026
    %1209 = vmatpush1.msra.mxu0 %v1025
    %1210 = vmatprep.subr.mxu0 %v1029
    %1211 = vmatpush1.msra.mxu0 %v1028
    %1212 = vmatprep.subr.mxu0 %v1032
    %1213 = vmatpush1.msra.mxu0 %v1031
    %1214 = vmatprep.subr.mxu0 %v1035
    %1215 = vmatpush1.msra.mxu0 %v1034
    %1216 = vmatprep.subr.mxu0 %v1038
    %1217 = vmatpush1.msra.mxu0 %v1037
    %1218 = vmatprep.subr.mxu0 %v1041
    %1219 = vmatpush1.msra.mxu0 %v1040
    %1220 = vmatprep.subr.mxu0 %v1044
    %1221 = vmatpush1.msra.mxu0 %v1043
    %1222 = vmatprep.subr.mxu0 %v1047
    %1223 = vmatpush1.msra.mxu0 %v1046
    %1224 = vmatprep.subr.mxu0 %v1050
    %1225 = vmatpush1.msra.mxu0 %v1049
    %1226 = vmatprep.subr.mxu0 %v1053
    %1227 = vmatpush1.msra.mxu0 %v1052
    %1228 = vmatprep.subr.mxu0 %v1056
    %1229 = vmatpush1.msra.mxu0 %v1055
    %1230 = vmatprep.subr.mxu0 %v1059
    %1231 = vmatpush1.msra.mxu0 %v1058
    %1232 = vmatprep.subr.mxu0 %v1062
    %1233 = vmatpush1.msra.mxu0 %v1061
    %1234 = vmatprep.subr.mxu0 %v1065
    %1235 = vmatpush1.msra.mxu0 %v1064
    %1236 = vmatprep.subr.mxu0 %v1068
    %1237 = vmatpush1.msra.mxu0 %v1067
    %1238 = vmatprep.subr.mxu0 %v1071
    %1239 = vmatpush1.msra.mxu0 %v1070
    %1240 = vmatprep.subr.mxu0 %v1074
    %1241 = vmatpush1.msra.mxu0 %v1073
    %1242 = vmatprep.subr.mxu0 %v1077
    %1243 = vmatpush1.msra.mxu0 %v1076
    %1244 = vmatprep.subr.mxu0 %v1080
    %1245 = vmatpush1.msra.mxu0 %v1079
    %1246 = vmatprep.subr.mxu0 %v1083
    %1247 = vmatpush1.msra.mxu0 %v1082
    %1248 = vmatprep.subr.mxu0 %v1086
    %1249 = vmatpush1.msra.mxu0 %v1085
    %1250 = vmatprep.subr.mxu0 %v1089
    %1251 = vmatpush1.msra.mxu0 %v1088
    %1252 = vmatprep.subr.mxu0 %v1092
    %1253 = vmatpush1.msra.mxu0 %v1091
    %1254 = vmatprep.subr.mxu0 %v1095
    %1255 = vmatpush1.msra.mxu0 %v1094
    %1256 = vmatprep.subr.mxu0 %v1098
    %1257 = vmatpush1.msra.mxu0 %v1097
    %1258 = vmatprep.subr.mxu0 %v1101
    %1259 = vmatpush1.msra.mxu0 %v1100
    %1260 = vmatprep.subr.mxu0 %v1104
    %1261 = vmatpush1.msra.mxu0 %v1103
    %1262 = vmatprep.subr.mxu0 %v1107
    %1263 = vmatpush1.msra.mxu0 %v1106
    %1264 = vmatprep.subr.mxu0 %v1110
    %1265 = vmatpush1.msra.mxu0 %v1109
    %1266 = vmatprep.subr.mxu0 %v1113
    %1267 = vmatpush1.msra.mxu0 %v1112
    %1268 = vmatprep.subr.mxu0 %v1116
    %1269 = vmatpush1.msra.mxu0 %v1115
    %1270 = vmatprep.mubr.f32.mxu0 %v431
    %1271 = vmatmul.mubr.f32.gmra.mrb[0].mxu0 %v430
    %v1272 = vpop.f32.mrb[0].mxu0
    %v1273 = vadd.f32 %v1202, %v1272
    %v1274 = vpop.f32.mrb[0].mxu0
    %v1275 = vadd.f32 %v1204, %v1274
    %1276 = vdwg.mxu0
    %1277 = vmatprep.subr.mxu0 0.0
    %1278 = vmatpush1.msra.mxu0 %v928
    %1279 = vmatprep.subr.mxu0 0.0
    %1280 = vmatpush1.msra.mxu0 %v931
    %1281 = vmatprep.subr.mxu0 0.0
    %1282 = vmatpush1.msra.mxu0 %v934
    %1283 = vmatprep.subr.mxu0 0.0
    %1284 = vmatpush1.msra.mxu0 %v937
    %1285 = vmatprep.subr.mxu0 0.0
    %1286 = vmatpush1.msra.mxu0 %v940
    %1287 = vmatprep.subr.mxu0 0.0
    %1288 = vmatpush1.msra.mxu0 %v943
    %1289 = vmatprep.subr.mxu0 0.0
    %1290 = vmatpush1.msra.mxu0 %v946
    %1291 = vmatprep.subr.mxu0 0.0
    %1292 = vmatpush1.msra.mxu0 %v949
    %1293 = vmatprep.subr.mxu0 0.0
    %1294 = vmatpush1.msra.mxu0 %v952
    %1295 = vmatprep.subr.mxu0 0.0
    %1296 = vmatpush1.msra.mxu0 %v955
    %1297 = vmatprep.subr.mxu0 0.0
    %1298 = vmatpush1.msra.mxu0 %v958
    %1299 = vmatprep.subr.mxu0 0.0
    %1300 = vmatpush1.msra.mxu0 %v961
    %1301 = vmatprep.subr.mxu0 0.0
    %1302 = vmatpush1.msra.mxu0 %v964
    %1303 = vmatprep.subr.mxu0 0.0
    %1304 = vmatpush1.msra.mxu0 %v967
    %1305 = vmatprep.subr.mxu0 0.0
    %1306 = vmatpush1.msra.mxu0 %v970
    %1307 = vmatprep.subr.mxu0 0.0
    %1308 = vmatpush1.msra.mxu0 %v973
    %1309 = vmatprep.subr.mxu0 0.0
    %1310 = vmatpush1.msra.mxu0 %v976
    %1311 = vmatprep.subr.mxu0 0.0
    %1312 = vmatpush1.msra.mxu0 %v979
    %1313 = vmatprep.subr.mxu0 0.0
    %1314 = vmatpush1.msra.mxu0 %v982
    %1315 = vmatprep.subr.mxu0 0.0
    %1316 = vmatpush1.msra.mxu0 %v985
    %1317 = vmatprep.subr.mxu0 0.0
    %1318 = vmatpush1.msra.mxu0 %v988
    %1319 = vmatprep.subr.mxu0 0.0
    %1320 = vmatpush1.msra.mxu0 %v991
    %1321 = vmatprep.subr.mxu0 0.0
    %1322 = vmatpush1.msra.mxu0 %v994
    %1323 = vmatprep.subr.mxu0 0.0
    %1324 = vmatpush1.msra.mxu0 %v997
    %1325 = vmatprep.subr.mxu0 0.0
    %1326 = vmatpush1.msra.mxu0 %v1000
    %1327 = vmatprep.subr.mxu0 0.0
    %1328 = vmatpush1.msra.mxu0 %v1003
    %1329 = vmatprep.subr.mxu0 0.0
    %1330 = vmatpush1.msra.mxu0 %v1006
    %1331 = vmatprep.subr.mxu0 0.0
    %1332 = vmatpush1.msra.mxu0 %v1009
    %1333 = vmatprep.subr.mxu0 0.0
    %1334 = vmatpush1.msra.mxu0 %v1012
    %1335 = vmatprep.subr.mxu0 0.0
    %1336 = vmatpush1.msra.mxu0 %v1015
    %1337 = vmatprep.subr.mxu0 0.0
    %1338 = vmatpush1.msra.mxu0 %v1018
    %1339 = vmatprep.subr.mxu0 0.0
    %1340 = vmatpush1.msra.mxu0 %v1021
    %1341 = vmatprep.mubr.f32.mxu0 %v429
    %1342 = vmatmul.mubr.f32.gmra.mrb[0].mxu0 %v428
    %v1343 = vpop.f32.mrb[0].mxu0
    %v1344 = vadd.f32 %v1131, %v1343
    %v1345 = vpop.f32.mrb[0].mxu0
    %1346 = vdwg.mxu0
    %1347 = vmatprep.subr.mxu0 0.0
    %1348 = vmatpush1.msra.mxu0 %v1024
    %1349 = vmatprep.subr.mxu0 0.0
    %1350 = vmatpush1.msra.mxu0 %v1027
    %1351 = vmatprep.subr.mxu0 0.0
    %1352 = vmatpush1.msra.mxu0 %v1030
    %1353 = vmatprep.subr.mxu0 0.0
    %1354 = vmatpush1.msra.mxu0 %v1033
    %1355 = vmatprep.subr.mxu0 0.0
    %1356 = vmatpush1.msra.mxu0 %v1036
    %1357 = vmatprep.subr.mxu0 0.0
    %1358 = vmatpush1.msra.mxu0 %v1039
    %1359 = vmatprep.subr.mxu0 0.0
    %1360 = vmatpush1.msra.mxu0 %v1042
    %1361 = vmatprep.subr.mxu0 0.0
    %1362 = vmatpush1.msra.mxu0 %v1045
    %1363 = vmatprep.subr.mxu0 0.0
    %1364 = vmatpush1.msra.mxu0 %v1048
    %1365 = vmatprep.subr.mxu0 0.0
    %1366 = vmatpush1.msra.mxu0 %v1051
    %1367 = vmatprep.subr.mxu0 0.0
    %1368 = vmatpush1.msra.mxu0 %v1054
    %1369 = vmatprep.subr.mxu0 0.0
    %1370 = vmatpush1.msra.mxu0 %v1057
    %1371 = vmatprep.subr.mxu0 0.0
    %1372 = vmatpush1.msra.mxu0 %v1060
    %1373 = vmatprep.subr.mxu0 0.0
    %1374 = vmatpush1.msra.mxu0 %v1063
    %1375 = vmatprep.subr.mxu0 0.0
    %1376 = vmatpush1.msra.mxu0 %v1066
    %1377 = vmatprep.subr.mxu0 0.0
    %1378 = vmatpush1.msra.mxu0 %v1069
    %1379 = vmatprep.subr.mxu0 0.0
    %1380 = vmatpush1.msra.mxu0 %v1072
    %1381 = vmatprep.subr.mxu0 0.0
    %1382 = vmatpush1.msra.mxu0 %v1075
    %1383 = vmatprep.subr.mxu0 0.0
    %1384 = vmatpush1.msra.mxu0 %v1078
    %1385 = vmatprep.subr.mxu0 0.0
    %1386 = vmatpush1.msra.mxu0 %v1081
    %1387 = vmatprep.subr.mxu0 0.0
    %1388 = vmatpush1.msra.mxu0 %v1084
    %1389 = vmatprep.subr.mxu0 0.0
    %1390 = vmatpush1.msra.mxu0 %v1087
    %1391 = vmatprep.subr.mxu0 0.0
    %1392 = vmatpush1.msra.mxu0 %v1090
    %1393 = vmatprep.subr.mxu0 0.0
    %1394 = vmatpush1.msra.mxu0 %v1093
    %1395 = vmatprep.subr.mxu0 0.0
    %1396 = vmatpush1.msra.mxu0 %v1096
    %1397 = vmatprep.subr.mxu0 0.0
    %1398 = vmatpush1.msra.mxu0 %v1099
    %1399 = vmatprep.subr.mxu0 0.0
    %1400 = vmatpush1.msra.mxu0 %v1102
    %1401 = vmatprep.subr.mxu0 0.0
    %1402 = vmatpush1.msra.mxu0 %v1105
    %1403 = vmatprep.subr.mxu0 0.0
    %1404 = vmatpush1.msra.mxu0 %v1108
    %1405 = vmatprep.subr.mxu0 0.0
    %1406 = vmatpush1.msra.mxu0 %v1111
    %1407 = vmatprep.subr.mxu0 0.0
    %1408 = vmatpush1.msra.mxu0 %v1114
    %1409 = vmatprep.subr.mxu0 0.0
    %1410 = vmatpush1.msra.mxu0 %v1117
    %1411 = vmatprep.mubr.f32.mxu0 %v431
    %1412 = vmatmul.mubr.f32.gmra.mrb[0].mxu0 %v430
    %v1413 = vpop.f32.mrb[0].mxu0
    %v1414 = vadd.f32 %v1344, %v1413
    %v1415 = vpop.f32.mrb[0].mxu0
    %1416 = vdwg.mxu0
    %v1417 = vmax.f32 %v1273, 0.0
    %v1418 = vmax.f32 %v1275, 0.0
    %v1419 = vmax.f32 %v1414, 0.0
    %v1420 = vld [vmem:[%s7] sm:$0xff]
    %v1421 = vld [vmem:[%s7 + $0x8] sm:$0xff]
    %v1422 = vld [vmem:[%s7 + $0x10] sm:$0xff]
    %v1423 = vld [vmem:[%s7 + $0x18] sm:$0xff]
    %v1424 = vld [vmem:[%s7 + $0x20] sm:$0xff]
    %v1425 = vld [vmem:[%s7 + $0x28] sm:$0xff]
    %v1426 = vld [vmem:[%s7 + $0x30] sm:$0xff]
    %v1427 = vld [vmem:[%s7 + $0x38] sm:$0xff]
    %v1428 = vld [vmem:[%s7 + $0x40] sm:$0xff]
    %v1429 = vld [vmem:[%s7 + $0x48] sm:$0xff]
    %v1430 = vld [vmem:[%s7 + $0x50] sm:$0xff]
    %v1431 = vld [vmem:[%s7 + $0x58] sm:$0xff]
    %v1432 = vld [vmem:[%s7 + $0x60] sm:$0xff]
    %v1433 = vld [vmem:[%s7 + $0x68] sm:$0xff]
    %v1434 = vld [vmem:[%s7 + $0x70] sm:$0xff]
    %v1435 = vld [vmem:[%s7 + $0x78] sm:$0xff]
    %v1436 = vld [vmem:[%s7 + $0x80] sm:$0xff]
    %v1437 = vld [vmem:[%s7 + $0x88] sm:$0xff]
    %v1438 = vld [vmem:[%s7 + $0x90] sm:$0xff]
    %v1439 = vld [vmem:[%s7 + $0x98] sm:$0xff]
    %v1440 = vld [vmem:[%s7 + $0xa0] sm:$0xff]
    %v1441 = vld [vmem:[%s7 + $0xa8] sm:$0xff]
    %v1442 = vld [vmem:[%s7 + $0xb0] sm:$0xff]
    %v1443 = vld [vmem:[%s7 + $0xb8] sm:$0xff]
    %v1444 = vld [vmem:[%s7 + $0xc0] sm:$0xff]
    %v1445 = vld [vmem:[%s7 + $0xc8] sm:$0xff]
    %v1446 = vld [vmem:[%s7 + $0xd0] sm:$0xff]
    %v1447 = vld [vmem:[%s7 + $0xd8] sm:$0xff]
    %v1448 = vld [vmem:[%s7 + $0xe0] sm:$0xff]
    %v1449 = vld [vmem:[%s7 + $0xe8] sm:$0xff]
    %v1450 = vld [vmem:[%s7 + $0xf0] sm:$0xff]
    %v1451 = vld [vmem:[%s7 + $0xf8] sm:$0xff]
    %v1452 = vld [vmem:[%s7 + $0x100] sm:$0xff]
    %v1453 = vld [vmem:[%s7 + $0x108] sm:$0xff]
    %v1454 = vld [vmem:[%s7 + $0x110] sm:$0xff]
    %v1455 = vld [vmem:[%s7 + $0x118] sm:$0xff]
    %v1456 = vld [vmem:[%s7 + $0x120] sm:$0xff]
    %v1457 = vld [vmem:[%s7 + $0x128] sm:$0xff]
    %v1458 = vld [vmem:[%s7 + $0x130] sm:$0xff]
    %v1459 = vld [vmem:[%s7 + $0x138] sm:$0xff]
    %v1460 = vld [vmem:[%s7 + $0x140] sm:$0xff]
    %v1461 = vld [vmem:[%s7 + $0x148] sm:$0xff]
    %v1462 = vld [vmem:[%s7 + $0x150] sm:$0xff]
    %v1463 = vld [vmem:[%s7 + $0x158] sm:$0xff]
    %v1464 = vld [vmem:[%s7 + $0x160] sm:$0xff]
    %v1465 = vld [vmem:[%s7 + $0x168] sm:$0xff]
    %v1466 = vld [vmem:[%s7 + $0x170] sm:$0xff]
    %v1467 = vld [vmem:[%s7 + $0x178] sm:$0xff]
    %v1468 = vld [vmem:[%s7 + $0x180] sm:$0xff]
    %v1469 = vld [vmem:[%s7 + $0x188] sm:$0xff]
    %v1470 = vld [vmem:[%s7 + $0x190] sm:$0xff]
    %v1471 = vld [vmem:[%s7 + $0x198] sm:$0xff]
    %v1472 = vld [vmem:[%s7 + $0x1a0] sm:$0xff]
    %v1473 = vld [vmem:[%s7 + $0x1a8] sm:$0xff]
    %v1474 = vld [vmem:[%s7 + $0x1b0] sm:$0xff]
    %v1475 = vld [vmem:[%s7 + $0x1b8] sm:$0xff]
    %v1476 = vld [vmem:[%s7 + $0x1c0] sm:$0xff]
    %v1477 = vld [vmem:[%s7 + $0x1c8] sm:$0xff]
    %v1478 = vld [vmem:[%s7 + $0x1d0] sm:$0xff]
    %v1479 = vld [vmem:[%s7 + $0x1d8] sm:$0xff]
    %v1480 = vld [vmem:[%s7 + $0x1e0] sm:$0xff]
    %v1481 = vld [vmem:[%s7 + $0x1e8] sm:$0xff]
    %v1482 = vld [vmem:[%s7 + $0x1f0] sm:$0xff]
    %v1483 = vld [vmem:[%s7 + $0x1f8] sm:$0xff]
    %v1484 = vld [vmem:[%s7 + $0x200] sm:$0xff]
    %v1485 = vld [vmem:[%s7 + $0x208] sm:$0xff]
    %v1486 = vld [vmem:[%s7 + $0x210] sm:$0xff]
    %v1487 = vld [vmem:[%s7 + $0x218] sm:$0xff]
    %v1488 = vld [vmem:[%s7 + $0x220] sm:$0xff]
    %v1489 = vld [vmem:[%s7 + $0x228] sm:$0xff]
    %v1490 = vld [vmem:[%s7 + $0x230] sm:$0xff]
    %v1491 = vld [vmem:[%s7 + $0x238] sm:$0xff]
    %v1492 = vld [vmem:[%s7 + $0x240] sm:$0xff]
    %v1493 = vld [vmem:[%s7 + $0x248] sm:$0xff]
    %v1494 = vld [vmem:[%s7 + $0x250] sm:$0xff]
    %v1495 = vld [vmem:[%s7 + $0x258] sm:$0xff]
    %v1496 = vld [vmem:[%s7 + $0x260] sm:$0xff]
    %v1497 = vld [vmem:[%s7 + $0x268] sm:$0xff]
    %v1498 = vld [vmem:[%s7 + $0x270] sm:$0xff]
    %v1499 = vld [vmem:[%s7 + $0x278] sm:$0xff]
    %v1500 = vld [vmem:[%s7 + $0x280] sm:$0xff]
    %v1501 = vld [vmem:[%s7 + $0x288] sm:$0xff]
    %v1502 = vld [vmem:[%s7 + $0x290] sm:$0xff]
    %v1503 = vld [vmem:[%s7 + $0x298] sm:$0xff]
    %v1504 = vld [vmem:[%s7 + $0x2a0] sm:$0xff]
    %v1505 = vld [vmem:[%s7 + $0x2a8] sm:$0xff]
    %v1506 = vld [vmem:[%s7 + $0x2b0] sm:$0xff]
    %v1507 = vld [vmem:[%s7 + $0x2b8] sm:$0xff]
    %v1508 = vld [vmem:[%s7 + $0x2c0] sm:$0xff]
    %v1509 = vld [vmem:[%s7 + $0x2c8] sm:$0xff]
    %v1510 = vld [vmem:[%s7 + $0x2d0] sm:$0xff]
    %v1511 = vld [vmem:[%s7 + $0x2d8] sm:$0xff]
    %v1512 = vld [vmem:[%s7 + $0x2e0] sm:$0xff]
    %v1513 = vld [vmem:[%s7 + $0x2e8] sm:$0xff]
    %v1514 = vld [vmem:[%s7 + $0x2f0] sm:$0xff]
    %v1515 = vld [vmem:[%s7 + $0x2f8] sm:$0xff]
    %v1516 = vld [vmem:[%s8] sm:$0x1]
    %v1518 = vlaneseq
    %v1519 = vshrl.u32 %v1518, 7
    %v1520 = vsub.s32 0, %v1519
    %v1521 = vrot.slane %v1516, %v1520
    %1523 = vmatprep.subr.mxu0 0.0
    %1524 = vmatpush1.msra.mxu0 %v1420
    %1525 = vmatprep.subr.mxu0 0.0
    %1526 = vmatpush1.msra.mxu0 %v1421
    %1527 = vmatprep.subr.mxu0 0.0
    %1528 = vmatpush1.msra.mxu0 %v1422
    %1529 = vmatprep.subr.mxu0 0.0
    %1530 = vmatpush1.msra.mxu0 %v1423
    %1531 = vmatprep.subr.mxu0 0.0
    %1532 = vmatpush1.msra.mxu0 %v1424
    %1533 = vmatprep.subr.mxu0 0.0
    %1534 = vmatpush1.msra.mxu0 %v1425
    %1535 = vmatprep.subr.mxu0 0.0
    %1536 = vmatpush1.msra.mxu0 %v1426
    %1537 = vmatprep.subr.mxu0 0.0
    %1538 = vmatpush1.msra.mxu0 %v1427
    %1539 = vmatprep.subr.mxu0 0.0
    %1540 = vmatpush1.msra.mxu0 %v1428
    %1541 = vmatprep.subr.mxu0 0.0
    %1542 = vmatpush1.msra.mxu0 %v1429
    %1543 = vmatprep.subr.mxu0 0.0
    %1544 = vmatpush1.msra.mxu0 %v1430
    %1545 = vmatprep.subr.mxu0 0.0
    %1546 = vmatpush1.msra.mxu0 %v1431
    %1547 = vmatprep.subr.mxu0 0.0
    %1548 = vmatpush1.msra.mxu0 %v1432
    %1549 = vmatprep.subr.mxu0 0.0
    %1550 = vmatpush1.msra.mxu0 %v1433
    %1551 = vmatprep.subr.mxu0 0.0
    %1552 = vmatpush1.msra.mxu0 %v1434
    %1553 = vmatprep.subr.mxu0 0.0
    %1554 = vmatpush1.msra.mxu0 %v1435
    %1555 = vmatprep.subr.mxu0 0.0
    %1556 = vmatpush1.msra.mxu0 %v1436
    %1557 = vmatprep.subr.mxu0 0.0
    %1558 = vmatpush1.msra.mxu0 %v1437
    %1559 = vmatprep.subr.mxu0 0.0
    %1560 = vmatpush1.msra.mxu0 %v1438
    %1561 = vmatprep.subr.mxu0 0.0
    %1562 = vmatpush1.msra.mxu0 %v1439
    %1563 = vmatprep.subr.mxu0 0.0
    %1564 = vmatpush1.msra.mxu0 %v1440
    %1565 = vmatprep.subr.mxu0 0.0
    %1566 = vmatpush1.msra.mxu0 %v1441
    %1567 = vmatprep.subr.mxu0 0.0
    %1568 = vmatpush1.msra.mxu0 %v1442
    %1569 = vmatprep.subr.mxu0 0.0
    %1570 = vmatpush1.msra.mxu0 %v1443
    %1571 = vmatprep.subr.mxu0 0.0
    %1572 = vmatpush1.msra.mxu0 %v1444
    %1573 = vmatprep.subr.mxu0 0.0
    %1574 = vmatpush1.msra.mxu0 %v1445
    %1575 = vmatprep.subr.mxu0 0.0
    %1576 = vmatpush1.msra.mxu0 %v1446
    %1577 = vmatprep.subr.mxu0 0.0
    %1578 = vmatpush1.msra.mxu0 %v1447
    %1579 = vmatprep.subr.mxu0 0.0
    %1580 = vmatpush1.msra.mxu0 %v1448
    %1581 = vmatprep.subr.mxu0 0.0
    %1582 = vmatpush1.msra.mxu0 %v1449
    %1583 = vmatprep.subr.mxu0 0.0
    %1584 = vmatpush1.msra.mxu0 %v1450
    %1585 = vmatprep.subr.mxu0 0.0
    %1586 = vmatpush1.msra.mxu0 %v1451
    %1587 = vmatprep.mubr.f32.mxu0 %v924
    %1588 = vmatmul.mubr.f32.gmra.mrb[0].mxu0 %v923
    %v1589 = vpop.f32.mrb[0].mxu0
    %v1590 = vadd.f32 %v1521, %v1589
    %v1591 = vpop.f32.mrb[0].mxu0
    %1592 = vdwg.mxu0
    %1593 = vmatprep.subr.mxu0 0.0
    %1594 = vmatpush1.msra.mxu0 %v1452
    %1595 = vmatprep.subr.mxu0 0.0
    %1596 = vmatpush1.msra.mxu0 %v1453
    %1597 = vmatprep.subr.mxu0 0.0
    %1598 = vmatpush1.msra.mxu0 %v1454
    %1599 = vmatprep.subr.mxu0 0.0
    %1600 = vmatpush1.msra.mxu0 %v1455
    %1601 = vmatprep.subr.mxu0 0.0
    %1602 = vmatpush1.msra.mxu0 %v1456
    %1603 = vmatprep.subr.mxu0 0.0
    %1604 = vmatpush1.msra.mxu0 %v1457
    %1605 = vmatprep.subr.mxu0 0.0
    %1606 = vmatpush1.msra.mxu0 %v1458
    %1607 = vmatprep.subr.mxu0 0.0
    %1608 = vmatpush1.msra.mxu0 %v1459
    %1609 = vmatprep.subr.mxu0 0.0
    %1610 = vmatpush1.msra.mxu0 %v1460
    %1611 = vmatprep.subr.mxu0 0.0
    %1612 = vmatpush1.msra.mxu0 %v1461
    %1613 = vmatprep.subr.mxu0 0.0
    %1614 = vmatpush1.msra.mxu0 %v1462
    %1615 = vmatprep.subr.mxu0 0.0
    %1616 = vmatpush1.msra.mxu0 %v1463
    %1617 = vmatprep.subr.mxu0 0.0
    %1618 = vmatpush1.msra.mxu0 %v1464
    %1619 = vmatprep.subr.mxu0 0.0
    %1620 = vmatpush1.msra.mxu0 %v1465
    %1621 = vmatprep.subr.mxu0 0.0
    %1622 = vmatpush1.msra.mxu0 %v1466
    %1623 = vmatprep.subr.mxu0 0.0
    %1624 = vmatpush1.msra.mxu0 %v1467
    %1625 = vmatprep.subr.mxu0 0.0
    %1626 = vmatpush1.msra.mxu0 %v1468
    %1627 = vmatprep.subr.mxu0 0.0
    %1628 = vmatpush1.msra.mxu0 %v1469
    %1629 = vmatprep.subr.mxu0 0.0
    %1630 = vmatpush1.msra.mxu0 %v1470
    %1631 = vmatprep.subr.mxu0 0.0
    %1632 = vmatpush1.msra.mxu0 %v1471
    %1633 = vmatprep.subr.mxu0 0.0
    %1634 = vmatpush1.msra.mxu0 %v1472
    %1635 = vmatprep.subr.mxu0 0.0
    %1636 = vmatpush1.msra.mxu0 %v1473
    %1637 = vmatprep.subr.mxu0 0.0
    %1638 = vmatpush1.msra.mxu0 %v1474
    %1639 = vmatprep.subr.mxu0 0.0
    %1640 = vmatpush1.msra.mxu0 %v1475
    %1641 = vmatprep.subr.mxu0 0.0
    %1642 = vmatpush1.msra.mxu0 %v1476
    %1643 = vmatprep.subr.mxu0 0.0
    %1644 = vmatpush1.msra.mxu0 %v1477
    %1645 = vmatprep.subr.mxu0 0.0
    %1646 = vmatpush1.msra.mxu0 %v1478
    %1647 = vmatprep.subr.mxu0 0.0
    %1648 = vmatpush1.msra.mxu0 %v1479
    %1649 = vmatprep.subr.mxu0 0.0
    %1650 = vmatpush1.msra.mxu0 %v1480
    %1651 = vmatprep.subr.mxu0 0.0
    %1652 = vmatpush1.msra.mxu0 %v1481
    %1653 = vmatprep.subr.mxu0 0.0
    %1654 = vmatpush1.msra.mxu0 %v1482
    %1655 = vmatprep.subr.mxu0 0.0
    %1656 = vmatpush1.msra.mxu0 %v1483
    %1657 = vmatprep.mubr.f32.mxu0 %v1417
    %1658 = vmatmul.mubr.f32.gmra.mrb[0].mxu0 %v925
    %v1659 = vpop.f32.mrb[0].mxu0
    %v1660 = vadd.f32 %v1590, %v1659
    %v1661 = vpop.f32.mrb[0].mxu0
    %1662 = vdwg.mxu0
    %1663 = vmatprep.subr.mxu0 0.0
    %1664 = vmatpush1.msra.mxu0 %v1484
    %1665 = vmatprep.subr.mxu0 0.0
    %1666 = vmatpush1.msra.mxu0 %v1485
    %1667 = vmatprep.subr.mxu0 0.0
    %1668 = vmatpush1.msra.mxu0 %v1486
    %1669 = vmatprep.subr.mxu0 0.0
    %1670 = vmatpush1.msra.mxu0 %v1487
    %1671 = vmatprep.subr.mxu0 0.0
    %1672 = vmatpush1.msra.mxu0 %v1488
    %1673 = vmatprep.subr.mxu0 0.0
    %1674 = vmatpush1.msra.mxu0 %v1489
    %1675 = vmatprep.subr.mxu0 0.0
    %1676 = vmatpush1.msra.mxu0 %v1490
    %1677 = vmatprep.subr.mxu0 0.0
    %1678 = vmatpush1.msra.mxu0 %v1491
    %1679 = vmatprep.subr.mxu0 0.0
    %1680 = vmatpush1.msra.mxu0 %v1492
    %1681 = vmatprep.subr.mxu0 0.0
    %1682 = vmatpush1.msra.mxu0 %v1493
    %1683 = vmatprep.subr.mxu0 0.0
    %1684 = vmatpush1.msra.mxu0 %v1494
    %1685 = vmatprep.subr.mxu0 0.0
    %1686 = vmatpush1.msra.mxu0 %v1495
    %1687 = vmatprep.subr.mxu0 0.0
    %1688 = vmatpush1.msra.mxu0 %v1496
    %1689 = vmatprep.subr.mxu0 0.0
    %1690 = vmatpush1.msra.mxu0 %v1497
    %1691 = vmatprep.subr.mxu0 0.0
    %1692 = vmatpush1.msra.mxu0 %v1498
    %1693 = vmatprep.subr.mxu0 0.0
    %1694 = vmatpush1.msra.mxu0 %v1499
    %1695 = vmatprep.subr.mxu0 0.0
    %1696 = vmatpush1.msra.mxu0 %v1500
    %1697 = vmatprep.subr.mxu0 0.0
    %1698 = vmatpush1.msra.mxu0 %v1501
    %1699 = vmatprep.subr.mxu0 0.0
    %1700 = vmatpush1.msra.mxu0 %v1502
    %1701 = vmatprep.subr.mxu0 0.0
    %1702 = vmatpush1.msra.mxu0 %v1503
    %1703 = vmatprep.subr.mxu0 0.0
    %1704 = vmatpush1.msra.mxu0 %v1504
    %1705 = vmatprep.subr.mxu0 0.0
    %1706 = vmatpush1.msra.mxu0 %v1505
    %1707 = vmatprep.subr.mxu0 0.0
    %1708 = vmatpush1.msra.mxu0 %v1506
    %1709 = vmatprep.subr.mxu0 0.0
    %1710 = vmatpush1.msra.mxu0 %v1507
    %1711 = vmatprep.subr.mxu0 0.0
    %1712 = vmatpush1.msra.mxu0 %v1508
    %1713 = vmatprep.subr.mxu0 0.0
    %1714 = vmatpush1.msra.mxu0 %v1509
    %1715 = vmatprep.subr.mxu0 0.0
    %1716 = vmatpush1.msra.mxu0 %v1510
    %1717 = vmatprep.subr.mxu0 0.0
    %1718 = vmatpush1.msra.mxu0 %v1511
    %1719 = vmatprep.subr.mxu0 0.0
    %1720 = vmatpush1.msra.mxu0 %v1512
    %1721 = vmatprep.subr.mxu0 0.0
    %1722 = vmatpush1.msra.mxu0 %v1513
    %1723 = vmatprep.subr.mxu0 0.0
    %1724 = vmatpush1.msra.mxu0 %v1514
    %1725 = vmatprep.subr.mxu0 0.0
    %1726 = vmatpush1.msra.mxu0 %v1515
    %1727 = vmatprep.mubr.f32.mxu0 %v1419
    %1728 = vmatmul.mubr.f32.gmra.mrb[0].mxu0 %v1418
    %v1729 = vpop.f32.mrb[0].mxu0
    %v1730 = vadd.f32 %v1660, %v1729
    %v1731 = vpop.f32.mrb[0].mxu0
    %1732 = vdwg.mxu0
    %vm1733 = vcmask 15360
    %1734 = vst.msk [vmem:[%s9] sm:$0xff] %vm1733, %v1730
    // Predicated region
    $region46: #{critic_forward.1} parent=1 // pred_check
      _
    $region47: #{critic_forward.1} parent=1 // pred_check_branch
      %1736 = sbr.rel (0) target = $region49
    $region48: #{critic_forward.1} parent=1 // pred_region
      _
    $region49: #{critic_forward.1} parent=1 // pred_fallthru
      _
    // Predicated region
    $region50: #{critic_forward.1} parent=1 // pred_check
      _
    $region51: #{critic_forward.1} parent=1 // pred_check_branch
      %1738 = sbr.rel (0) target = $region53
    $region52: #{critic_forward.1} parent=1 // pred_region
      _
    $region53: #{critic_forward.1} parent=1 // pred_fallthru
      _
    %1739 = vsyncpa [#allocation3], 1
    %1740 = vsyncpa [#allocation5], 1

</llo_original>
